<compile_context>
chip_gen: v7x
topology: tpu7x:2x2x1
jax: 0.10.0
libtpu: 0.0.40
codegen_flags: <defaults>
</compile_context>

<pallas_src>
import functools

import jax
import jax.numpy as jnp
from jax import lax
from jax.experimental import pallas as pl
from jax.experimental.pallas import tpu as pltpu


# Per-block byte budget for the auto row-tile choice (double-buffered in+out
# blocks then stay far inside every generation's VMEM).
_BLOCK_BUDGET_BYTES = 4 << 20
# Raised scoped-VMEM limit: fine on v5e/v6e (128 MiB physical) and leaves
# headroom on v7x (64 MiB physical).
_VMEM_LIMIT_BYTES = 48 << 20


def _compiler_params():
    return pltpu.CompilerParams(
        dimension_semantics=("parallel", "parallel"),
        vmem_limit_bytes=_VMEM_LIMIT_BYTES,
    )


def _choose_row_tile(H, W, bytes_per_row, budget_bytes=_BLOCK_BUDGET_BYTES):
    """Largest row tile TR dividing H with (TR*W) % 128 == 0 (lane-dense output
    blocks) whose per-step block bytes fit the budget."""
    valid = [d for d in range(1, H + 1)
             if H % d == 0 and ((d * W) % 128 == 0 or d == H)]
    fitting = [d for d in valid if d * bytes_per_row <= budget_bytes]
    # TODO(synk): if no lane-aligned divisor fits the budget this falls back to
    # the smallest valid tile (worst case: the full image).
    return max(fitting) if fitting else min(valid)


# ----------------------------------------------------------------------------
# Pallas kernels
# ----------------------------------------------------------------------------

def _conv3x3_kernel(x_ref, h0_ref, h1_ref, w_ref, b_ref, y_ref, *rest, add_bias):
    """Fused reflect-padded 3x3 conv for one (image, row-tile) grid step.

      x_ref  : (1, TR*W, 3*Cin)  width-folded image rows [r*TR, r*TR+TR)
      h0_ref : (1, W, 3*Cin)     padded row r*TR+TR   (halo)
      h1_ref : (1, W, 3*Cin)     padded row r*TR+TR+1 (halo)
      w_ref  : (3, Cout, 3*Cin)  taps, w[di, co, dj*Cin+ci]  (resident)
      b_ref  : (Cout, 1)         bias / folded BN shift (used iff add_bias)
      y_ref  : (1, Cout, TR*W)   channels-major, lane-dense output block
      rest   : [sum_ref, sq_ref (training only)], xw_scratch
    """
    xw_ref = rest[-1]                      # ((TR+2)*W, 3*Cin) VMEM staging
    stat_refs = rest[:-1]
    TRW = x_ref.shape[1]
    W = h0_ref.shape[1]

    # Stage main tile + 2 halo rows contiguously so the 3 row-shifted windows
    # are plain aligned slices (offsets 0, W, 2W with W % 8 == 0).  One small
    # in-VMEM copy; the buffer then feeds 3 MXU matmuls.
    xw_ref[0:TRW, :] = x_ref[0]
    xw_ref[TRW:TRW + W, :] = h0_ref[0]
    xw_ref[TRW + W:TRW + 2 * W, :] = h1_ref[0]

    acc = None
    for di in range(3):                    # static unroll: 3 matmuls, K = 3*Cin
        win = xw_ref[di * W:di * W + TRW, :]            # (TR*W, 3*Cin)
        part = lax.dot_general(
            w_ref[di], win,
            dimension_numbers=(((1,), (1,)), ((), ())),  # (Cout, TR*W)
            preferred_element_type=jnp.float32)
        acc = part if acc is None else acc + part

    if add_bias:                           # eval: folded BN shift (f32 epilogue)
        acc = acc + b_ref[...]
    y_ref[0] = acc

    if stat_refs:                          # training: per-channel partial stats
        sum_ref, sq_ref = stat_refs
        sum_ref[0, 0] = jnp.sum(acc, axis=1, keepdims=True)
        sq_ref[0, 0] = jnp.sum(acc * acc, axis=1, keepdims=True)


def _bn_affine_kernel(y_ref, scale_ref, shift_ref, o_ref):
    """o = y * scale + shift, channels on the sublane axis, lane-dense blocks."""
    o_ref[0] = y_ref[0] * scale_ref[...] + shift_ref[...]


# ----------------------------------------------------------------------------
# Pallas wrappers
# ----------------------------------------------------------------------------

def _conv3x3_call(x3f, w3, b, *, H, W, Cout, TR, with_stats, add_bias):
    N = x3f.shape[0]
    KC = x3f.shape[-1]
    TRW = TR * W
    n_rt = H // TR

    y_shape = jax.ShapeDtypeStruct((N, Cout, H * W), jnp.float32)
    y_spec = pl.BlockSpec((1, Cout, TRW), lambda n, r: (n, 0, r))
    if with_stats:
        stat_shape = jax.ShapeDtypeStruct((N, n_rt, Cout, 1), jnp.float32)
        stat_spec = pl.BlockSpec((1, 1, Cout, 1), lambda n, r: (n, r, 0, 0))
        out_shape = (y_shape, stat_shape, stat_shape)
        out_specs = (y_spec, stat_spec, stat_spec)
    else:
        out_shape = y_shape
        out_specs = y_spec

    kernel = functools.partial(_conv3x3_kernel, add_bias=add_bias)
    return pl.pallas_call(
        kernel,
        out_shape=out_shape,
        grid=(N, n_rt),
        in_specs=[
            # main row tile of the width-folded, flattened padded image
            pl.BlockSpec((1, TRW, KC), lambda n, r: (n, r, 0)),
            # 2-row halo fetched as two 1-row blocks (block = one padded row)
            pl.BlockSpec((1, W, KC), lambda n, r: (n, (r + 1) * TR, 0)),
            pl.BlockSpec((1, W, KC), lambda n, r: (n, (r + 1) * TR + 1, 0)),
            # weights / bias: resident across the whole grid
            pl.BlockSpec((3, Cout, KC), lambda n, r: (0, 0, 0)),
            pl.BlockSpec((Cout, 1), lambda n, r: (0, 0)),
        ],
        out_specs=out_specs,
        scratch_shapes=[pltpu.VMEM(((TR + 2) * W, KC), x3f.dtype)],
        compiler_params=_compiler_params(),
    )(x3f, x3f, x3f, w3, b)


def _bn_affine_call(y, scale, shift, *, col_tile):
    N, C, HW = y.shape
    n_ct = HW // col_tile
    return pl.pallas_call(
        _bn_affine_kernel,
        out_shape=jax.ShapeDtypeStruct((N, C, HW), jnp.float32),
        grid=(N, n_ct),
        in_specs=[
            pl.BlockSpec((1, C, col_tile), lambda n, c: (n, 0, c)),
            pl.BlockSpec((C, 1), lambda n, c: (0, 0)),
            pl.BlockSpec((C, 1), lambda n, c: (0, 0)),
        ],
        out_specs=pl.BlockSpec((1, C, col_tile), lambda n, c: (n, 0, c)),
        compiler_params=_compiler_params(),
    )(y, scale, shift)


# ----------------------------------------------------------------------------
# ConBlock forward
# ----------------------------------------------------------------------------

def con_block_forward(x, kp, *, training=True, eps=1e-5,
                      mxu_dtype=jnp.bfloat16, row_tile=None):
    """ConBlock forward: bn(conv3x3(reflect_pad1(x))).  x is NCHW f32.

    training=True  -> BatchNorm uses batch statistics (PyTorch default state).
    training=False -> BatchNorm uses running stats; the whole BN affine is
                      folded into the conv (single pallas_call).
    """
    N, Cin, H, W = x.shape
    Cout = kp["w3"].shape[1]
    if W % 8 != 0:
        raise NotImplementedError("W must be a multiple of 8 (pad the image).")
    Hp = H + 2
    KC = 3 * Cin

    in_bytes = jnp.dtype(mxu_dtype).itemsize
    bytes_per_row = W * (KC * in_bytes + Cout * 4)
    if row_tile is not None:
        TR = row_tile
        if H % TR or ((TR * W) % 128 and TR != H):
            raise ValueError("row_tile must divide H with TR*W a multiple of 128")
    else:
        TR = _choose_row_tile(H, W, bytes_per_row)

    # Layout glue (one fused producer, materialised once in the MXU dtype):
    # NCHW -> NHWC -> reflect pad -> fold the 3 width taps into channels ->
    # flatten rows.  x3f[n, p*W + j, dj*Cin + ci] = xpad[n, p, j + dj, ci].
    xh = jnp.transpose(x, (0, 2, 3, 1))
    xpad = jnp.pad(xh, ((0, 0), (1, 1), (1, 1), (0, 0)), mode="reflect")
    x3 = jnp.concatenate([xpad[:, :, dj:dj + W, :] for dj in range(3)], axis=-1)
    x3f = x3.reshape(N, Hp * W, KC).astype(mxu_dtype)

    if training:
        # Conv bias cancels exactly under batch-statistic BatchNorm -> drop it.
        w_eff = kp["w3"]
        b_eff = jnp.zeros((Cout, 1), jnp.float32)
        add_bias = False
    else:
        scale0 = kp["gamma"] / jnp.sqrt(kp["var"] + eps)          # (Cout,)
        w_eff = kp["w3"] * scale0[None, :, None]
        b_eff = ((kp["b"] - kp["mean"]) * scale0 + kp["beta"]).reshape(Cout, 1)
        add_bias = True

    outs = _conv3x3_call(x3f, w_eff.astype(mxu_dtype), b_eff,
                         H=H, W=W, Cout=Cout, TR=TR,
                         with_stats=training, add_bias=add_bias)

    if training:
        y, s, q = outs
        cnt = N * H * W
        mean = jnp.sum(s, axis=(0, 1)) / cnt                      # (Cout, 1)
        ex2 = jnp.sum(q, axis=(0, 1)) / cnt
        var = jnp.maximum(ex2 - mean * mean, 0.0)                 # biased var
        scale = kp["gamma"].reshape(Cout, 1) / jnp.sqrt(var + eps)
        shift = kp["beta"].reshape(Cout, 1) - mean * scale
        y = _bn_affine_call(y, scale, shift, col_tile=TR * W)
    else:
        y = outs

    # Channels-major layout means the NCHW result is a free metadata reshape.
    return y.reshape(N, Cout, H, W)


# ----------------------------------------------------------------------------
# Parameters (PyTorch layout) + one-time relayout for the kernels
# ----------------------------------------------------------------------------

def init_params(key, in_c, out_c):
    """PyTorch-like init: Conv2d uniform(-1/sqrt(fan_in), .), BN defaults."""
    k1, k2 = jax.random.split(key)
    bound = 1.0 / (in_c * 9) ** 0.5
    return {
        "conv_w": jax.random.uniform(k1, (out_c, in_c, 3, 3), jnp.float32,
                                     -bound, bound),
        "conv_b": jax.random.uniform(k2, (out_c,), jnp.float32, -bound, bound),
        "bn_gamma": jnp.ones((out_c,), jnp.float32),
        "bn_beta": jnp.zeros((out_c,), jnp.float32),
        "bn_mean": jnp.zeros((out_c,), jnp.float32),
        "bn_var": jnp.ones((out_c,), jnp.float32),
    }


def prepare_params(p):
    """One-time relayout (outside jit): (O,I,3,3) -> (3, O, 3*I) with the
    width tap folded next to the input channel (matches x3f packing)."""
    w = p["conv_w"]
    out_c, in_c = w.shape[0], w.shape[1]
    w3 = jnp.transpose(w, (2, 0, 3, 1)).reshape(3, out_c, 3 * in_c)
    return {
        "w3": w3,
        "b": p["conv_b"],
        "gamma": p["bn_gamma"],
        "beta": p["bn_beta"],
        "mean": p["bn_mean"],
        "var": p["bn_var"],
    }


# ----------------------------------------------------------------------------
# Pure-JAX reference (for correctness checking only)
# ----------------------------------------------------------------------------

def _reference_forward(x, p, training=True, eps=1e-5):
    xp = jnp.pad(x, ((0, 0), (0, 0), (1, 1), (1, 1)), mode="reflect")
    y = lax.conv_general_dilated(xp, p["conv_w"], (1, 1), "VALID",
                                 dimension_numbers=("NCHW", "OIHW", "NCHW"))
    y = y + p["conv_b"].reshape(1, -1, 1, 1)
    if training:
        mean = jnp.mean(y, axis=(0, 2, 3))
        var = jnp.var(y, axis=(0, 2, 3))
    else:
        mean, var = p["bn_mean"], p["bn_var"]
    g = p["bn_gamma"].reshape(1, -1, 1, 1)
    b = p["bn_beta"].reshape(1, -1, 1, 1)
    return (y - mean.reshape(1, -1, 1, 1)) / jnp.sqrt(
        var.reshape(1, -1, 1, 1) + eps) * g + b


# ----------------------------------------------------------------------------
# Demo / smoke test
# ----------------------------------------------------------------------------

if __name__ == "__main__":
    N, Cin, H, W, Cout = 2, 4, 16, 16, 8
    key = jax.random.PRNGKey(0)
    kx, kparam = jax.random.split(key)
    x = jax.random.normal(kx, (N, Cin, H, W), dtype=jnp.float32)

    torch_params = init_params(kparam, Cin, Cout)
    kparams = prepare_params(torch_params)          # one-time, outside jit

    # row_tile=8 forces 2 row tiles per image (exercises halo indexing across
    # tiles); the bf16 runs use the auto-chosen tile (full 16 rows here).
    fwd_train_f32 = jax.jit(functools.partial(
        con_block_forward, training=True, mxu_dtype=jnp.float32, row_tile=8))
    fwd_eval_f32 = jax.jit(functools.partial(
        con_block_forward, training=False, mxu_dtype=jnp.float32, row_tile=8))
    fwd_train_bf16 = jax.jit(functools.partial(con_block_forward, training=True))
    fwd_eval_bf16 = jax.jit(functools.partial(con_block_forward, training=False))

    out_train = jax.block_until_ready(fwd_train_f32(x, kparams))
    out_eval = jax.block_until_ready(fwd_eval_f32(x, kparams))
    out_train_bf = jax.block_until_ready(fwd_train_bf16(x, kparams))
    out_eval_bf = jax.block_until_ready(fwd_eval_bf16(x, kparams))

    ref_train = _reference_forward(x, torch_params, training=True)
    ref_eval = _reference_forward(x, torch_params, training=False)

    assert out_train.shape == (N, Cout, H, W)
    assert out_eval.shape == (N, Cout, H, W)
    assert bool(jnp.allclose(out_train, ref_train, atol=2e-2, rtol=2e-2))
    assert bool(jnp.allclose(out_eval, ref_eval, atol=2e-2, rtol=2e-2))
    # bf16 MXU path is validated against the reference too (review feedback).
    assert bool(jnp.allclose(out_train_bf, ref_train, atol=6e-2, rtol=6e-2))
    assert bool(jnp.allclose(out_eval_bf, ref_eval, atol=6e-2, rtol=6e-2))
    print("KERNEL_OK")
</pallas_src>

<mosaic_0001>
module attributes {stable_mosaic.version = 11 : i64} {
  func.func @_conv3x3_kernel(%arg0: i32, %arg1: i32, %arg2: memref<1x128x12xf32, #tpu.memory_space<vmem>>, %arg3: memref<1x16x12xf32, #tpu.memory_space<vmem>>, %arg4: memref<1x16x12xf32, #tpu.memory_space<vmem>>, %arg5: memref<3x8x12xf32, #tpu.memory_space<vmem>>, %arg6: memref<8x1xf32, #tpu.memory_space<vmem>>, %arg7: memref<1x8x128xf32, #tpu.memory_space<vmem>>, %arg8: memref<1x1x8x1xf32, #tpu.memory_space<vmem>>, %arg9: memref<1x1x8x1xf32, #tpu.memory_space<vmem>>, %arg10: memref<160x12xf32, #tpu.memory_space<vmem>>) attributes {dimension_semantics = [#tpu.dimension_semantics<parallel>, #tpu.dimension_semantics<parallel>], iteration_bounds = array<i64: 2, 2>, scalar_prefetch = 0 : i64, scratch_operands = 1 : i64, tpu.core_type = #tpu.core_type<tc>, window_params = [{transform_indices = @transform_0, window_bounds = array<i64: 1, 128, 12>}, {transform_indices = @transform_1, window_bounds = array<i64: 1, 16, 12>}, {transform_indices = @transform_2, window_bounds = array<i64: 1, 16, 12>}, {pipeline_mode = #tpu.pipeline_mode<synchronous>, transform_indices = @transform_3, window_bounds = array<i64: 3, 8, 12>}, {pipeline_mode = #tpu.pipeline_mode<synchronous>, transform_indices = @transform_4, window_bounds = array<i64: 8, 1>}, {transform_indices = @transform_5, window_bounds = array<i64: 1, 8, 128>}, {transform_indices = @transform_6, window_bounds = array<i64: 1, 1, 8, 1>}, {transform_indices = @transform_7, window_bounds = array<i64: 1, 1, 8, 1>}]} {
    %c0 = arith.constant 0 : index
    %c0_0 = arith.constant 0 : index
    %c0_1 = arith.constant 0 : index
    %0 = vector.load %arg2[%c0, %c0_0, %c0_1] : memref<1x128x12xf32, #tpu.memory_space<vmem>>, vector<1x128x12xf32>
    %1 = vector.shape_cast %0 : vector<1x128x12xf32> to vector<128x12xf32>
    %c0_2 = arith.constant 0 : index
    %c0_3 = arith.constant 0 : index
    %2 = vector.load %arg10[%c0_2, %c0_3] : memref<160x12xf32, #tpu.memory_space<vmem>>, vector<128x12xf32>
    tpu.vector_store %arg10[%c0_2, %c0_3], %1 {strides = array<i32>} : memref<160x12xf32, #tpu.memory_space<vmem>>, vector<128x12xf32>,
    %c0_4 = arith.constant 0 : index
    %c0_5 = arith.constant 0 : index
    %c0_6 = arith.constant 0 : index
    %3 = vector.load %arg3[%c0_4, %c0_5, %c0_6] : memref<1x16x12xf32, #tpu.memory_space<vmem>>, vector<1x16x12xf32>
    %4 = vector.shape_cast %3 : vector<1x16x12xf32> to vector<16x12xf32>
    %c128 = arith.constant 128 : index
    %c0_7 = arith.constant 0 : index
    %5 = vector.load %arg10[%c128, %c0_7] : memref<160x12xf32, #tpu.memory_space<vmem>>, vector<16x12xf32>
    tpu.vector_store %arg10[%c128, %c0_7], %4 {strides = array<i32>} : memref<160x12xf32, #tpu.memory_space<vmem>>, vector<16x12xf32>,
    %c0_8 = arith.constant 0 : index
    %c0_9 = arith.constant 0 : index
    %c0_10 = arith.constant 0 : index
    %6 = vector.load %arg4[%c0_8, %c0_9, %c0_10] : memref<1x16x12xf32, #tpu.memory_space<vmem>>, vector<1x16x12xf32>
    %7 = vector.shape_cast %6 : vector<1x16x12xf32> to vector<16x12xf32>
    %c144 = arith.constant 144 : index
    %c0_11 = arith.constant 0 : index
    %8 = vector.load %arg10[%c144, %c0_11] : memref<160x12xf32, #tpu.memory_space<vmem>>, vector<16x12xf32>
    tpu.vector_store %arg10[%c144, %c0_11], %7 {strides = array<i32>} : memref<160x12xf32, #tpu.memory_space<vmem>>, vector<16x12xf32>,
    %c0_12 = arith.constant 0 : index
    %c0_13 = arith.constant 0 : index
    %9 = vector.load %arg10[%c0_12, %c0_13] : memref<160x12xf32, #tpu.memory_space<vmem>>, vector<128x12xf32>
    %c0_14 = arith.constant 0 : index
    %c0_15 = arith.constant 0 : index
    %c0_16 = arith.constant 0 : index
    %10 = vector.load %arg5[%c0_14, %c0_15, %c0_16] : memref<3x8x12xf32, #tpu.memory_space<vmem>>, vector<1x8x12xf32>
    %11 = vector.shape_cast %10 : vector<1x8x12xf32> to vector<8x12xf32>
    %cst = arith.constant dense<0.000000e+00> : vector<8x128xf32>
    %12 = tpu.matmul %11, %9, %cst {dimension_numbers = #tpu.dot_dimension_numbers<[1], [1], [0], [0], [0, 0, 1, 0], [], []>} : vector<8x12xf32>, vector<128x12xf32>, vector<8x128xf32> -> vector<8x128xf32>
    %c16 = arith.constant 16 : index
    %c0_17 = arith.constant 0 : index
    %13 = vector.load %arg10[%c16, %c0_17] : memref<160x12xf32, #tpu.memory_space<vmem>>, vector<128x12xf32>
    %c1 = arith.constant 1 : index
    %c0_18 = arith.constant 0 : index
    %c0_19 = arith.constant 0 : index
    %14 = vector.load %arg5[%c1, %c0_18, %c0_19] : memref<3x8x12xf32, #tpu.memory_space<vmem>>, vector<1x8x12xf32>
    %15 = vector.shape_cast %14 : vector<1x8x12xf32> to vector<8x12xf32>
    %cst_20 = arith.constant dense<0.000000e+00> : vector<8x128xf32>
    %16 = tpu.matmul %15, %13, %cst_20 {dimension_numbers = #tpu.dot_dimension_numbers<[1], [1], [0], [0], [0, 0, 1, 0], [], []>} : vector<8x12xf32>, vector<128x12xf32>, vector<8x128xf32> -> vector<8x128xf32>
    %17 = arith.addf %12, %16 : vector<8x128xf32>
    %c32 = arith.constant 32 : index
    %c0_21 = arith.constant 0 : index
    %18 = vector.load %arg10[%c32, %c0_21] : memref<160x12xf32, #tpu.memory_space<vmem>>, vector<128x12xf32>
    %c2 = arith.constant 2 : index
    %c0_22 = arith.constant 0 : index
    %c0_23 = arith.constant 0 : index
    %19 = vector.load %arg5[%c2, %c0_22, %c0_23] : memref<3x8x12xf32, #tpu.memory_space<vmem>>, vector<1x8x12xf32>
    %20 = vector.shape_cast %19 : vector<1x8x12xf32> to vector<8x12xf32>
    %cst_24 = arith.constant dense<0.000000e+00> : vector<8x128xf32>
    %21 = tpu.matmul %20, %18, %cst_24 {dimension_numbers = #tpu.dot_dimension_numbers<[1], [1], [0], [0], [0, 0, 1, 0], [], []>} : vector<8x12xf32>, vector<128x12xf32>, vector<8x128xf32> -> vector<8x128xf32>
    %22 = arith.addf %17, %21 : vector<8x128xf32>
    %c0_25 = arith.constant 0 : index
    %c0_26 = arith.constant 0 : index
    %c0_27 = arith.constant 0 : index
    %23 = vector.load %arg7[%c0_25, %c0_26, %c0_27] : memref<1x8x128xf32, #tpu.memory_space<vmem>>, vector<1x8x128xf32>
    %24 = vector.shape_cast %23 : vector<1x8x128xf32> to vector<8x128xf32>
    %25 = vector.shape_cast %22 : vector<8x128xf32> to vector<1x8x128xf32>
    tpu.vector_store %arg7[%c0_25, %c0_26, %c0_27], %25 {strides = array<i32>} : memref<1x8x128xf32, #tpu.memory_space<vmem>>, vector<1x8x128xf32>,
    %cst_28 = arith.constant dense<0.000000e+00> : vector<8xf32>
    %26 = vector.multi_reduction <add>, %22, %cst_28 [1] : vector<8x128xf32> to vector<8xf32>
    %27 = vector.shape_cast %26 : vector<8xf32> to vector<8x1xf32>
    %c0_29 = arith.constant 0 : index
    %c0_30 = arith.constant 0 : index
    %c0_31 = arith.constant 0 : index
    %c0_32 = arith.constant 0 : index
    %28 = vector.load %arg8[%c0_29, %c0_30, %c0_31, %c0_32] : memref<1x1x8x1xf32, #tpu.memory_space<vmem>>, vector<1x1x8x1xf32>
    %29 = vector.shape_cast %28 : vector<1x1x8x1xf32> to vector<8x1xf32>
    %30 = vector.shape_cast %27 : vector<8x1xf32> to vector<1x1x8x1xf32>
    tpu.vector_store %arg8[%c0_29, %c0_30, %c0_31, %c0_32], %30 {strides = array<i32>} : memref<1x1x8x1xf32, #tpu.memory_space<vmem>>, vector<1x1x8x1xf32>,
    %31 = arith.mulf %22, %22 : vector<8x128xf32>
    %cst_33 = arith.constant dense<0.000000e+00> : vector<8xf32>
    %32 = vector.multi_reduction <add>, %31, %cst_33 [1] : vector<8x128xf32> to vector<8xf32>
    %33 = vector.shape_cast %32 : vector<8xf32> to vector<8x1xf32>
    %c0_34 = arith.constant 0 : index
    %c0_35 = arith.constant 0 : index
    %c0_36 = arith.constant 0 : index
    %c0_37 = arith.constant 0 : index
    %34 = vector.load %arg9[%c0_34, %c0_35, %c0_36, %c0_37] : memref<1x1x8x1xf32, #tpu.memory_space<vmem>>, vector<1x1x8x1xf32>
    %35 = vector.shape_cast %34 : vector<1x1x8x1xf32> to vector<8x1xf32>
    %36 = vector.shape_cast %33 : vector<8x1xf32> to vector<1x1x8x1xf32>
    tpu.vector_store %arg9[%c0_34, %c0_35, %c0_36, %c0_37], %36 {strides = array<i32>} : memref<1x1x8x1xf32, #tpu.memory_space<vmem>>, vector<1x1x8x1xf32>,
    return
  }
  func.func @transform_0(%arg0: i32, %arg1: i32) -> (i32, i32, i32) {
    %c0_i32 = arith.constant 0 : i32
    %c0_i32_0 = arith.constant 0 : i32
    return %arg0, %arg1, %c0_i32 : i32, i32, i32
  }
  func.func @transform_1(%arg0: i32, %arg1: i32) -> (i32, i32, i32) {
    %c1_i32 = arith.constant 1 : i32
    %0 = arith.addi %arg1, %c1_i32 : i32
    %c8_i32 = arith.constant 8 : i32
    %1 = arith.muli %0, %c8_i32 : i32
    %c0_i32 = arith.constant 0 : i32
    %c0_i32_0 = arith.constant 0 : i32
    return %arg0, %1, %c0_i32 : i32, i32, i32
  }
  func.func @transform_2(%arg0: i32, %arg1: i32) -> (i32, i32, i32) {
    %c1_i32 = arith.constant 1 : i32
    %0 = arith.addi %arg1, %c1_i32 : i32
    %c8_i32 = arith.constant 8 : i32
    %1 = arith.muli %0, %c8_i32 : i32
    %c1_i32_0 = arith.constant 1 : i32
    %2 = arith.addi %1, %c1_i32_0 : i32
    %c0_i32 = arith.constant 0 : i32
    %c0_i32_1 = arith.constant 0 : i32
    return %arg0, %2, %c0_i32 : i32, i32, i32
  }
  func.func @transform_3(%arg0: i32, %arg1: i32) -> (i32, i32, i32) {
    %c0_i32 = arith.constant 0 : i32
    %c0_i32_0 = arith.constant 0 : i32
    %c0_i32_1 = arith.constant 0 : i32
    %c0_i32_2 = arith.constant 0 : i32
    return %c0_i32, %c0_i32_0, %c0_i32_1 : i32, i32, i32
  }
  func.func @transform_4(%arg0: i32, %arg1: i32) -> (i32, i32) {
    %c0_i32 = arith.constant 0 : i32
    %c0_i32_0 = arith.constant 0 : i32
    %c0_i32_1 = arith.constant 0 : i32
    return %c0_i32, %c0_i32_0 : i32, i32
  }
  func.func @transform_5(%arg0: i32, %arg1: i32) -> (i32, i32, i32) {
    %c0_i32 = arith.constant 0 : i32
    %c0_i32_0 = arith.constant 0 : i32
    return %arg0, %c0_i32, %arg1 : i32, i32, i32
  }
  func.func @transform_6(%arg0: i32, %arg1: i32) -> (i32, i32, i32, i32) {
    %c0_i32 = arith.constant 0 : i32
    %c0_i32_0 = arith.constant 0 : i32
    %c0_i32_1 = arith.constant 0 : i32
    return %arg0, %arg1, %c0_i32, %c0_i32_0 : i32, i32, i32, i32
  }
  func.func @transform_7(%arg0: i32, %arg1: i32) -> (i32, i32, i32, i32) {
    %c0_i32 = arith.constant 0 : i32
    %c0_i32_0 = arith.constant 0 : i32
    %c0_i32_1 = arith.constant 0 : i32
    return %arg0, %arg1, %c0_i32, %c0_i32_0 : i32, i32, i32, i32
  }
}

module attributes {stable_mosaic.version = 11 : i64} {
  func.func @_bn_affine_kernel(%arg0: i32, %arg1: i32, %arg2: memref<1x8x128xf32, #tpu.memory_space<vmem>>, %arg3: memref<8x1xf32, #tpu.memory_space<vmem>>, %arg4: memref<8x1xf32, #tpu.memory_space<vmem>>, %arg5: memref<1x8x128xf32, #tpu.memory_space<vmem>>) attributes {dimension_semantics = [#tpu.dimension_semantics<parallel>, #tpu.dimension_semantics<parallel>], iteration_bounds = array<i64: 2, 2>, scalar_prefetch = 0 : i64, scratch_operands = 0 : i64, tpu.core_type = #tpu.core_type<tc>, window_params = [{transform_indices = @transform_0, window_bounds = array<i64: 1, 8, 128>}, {pipeline_mode = #tpu.pipeline_mode<synchronous>, transform_indices = @transform_1, window_bounds = array<i64: 8, 1>}, {pipeline_mode = #tpu.pipeline_mode<synchronous>, transform_indices = @transform_2, window_bounds = array<i64: 8, 1>}, {transform_indices = @transform_3, window_bounds = array<i64: 1, 8, 128>}]} {
    %c0 = arith.constant 0 : index
    %c0_0 = arith.constant 0 : index
    %c0_1 = arith.constant 0 : index
    %0 = vector.load %arg2[%c0, %c0_0, %c0_1] : memref<1x8x128xf32, #tpu.memory_space<vmem>>, vector<1x8x128xf32>
    %1 = vector.shape_cast %0 : vector<1x8x128xf32> to vector<8x128xf32>
    %c0_2 = arith.constant 0 : index
    %c0_3 = arith.constant 0 : index
    %2 = vector.load %arg3[%c0_2, %c0_3] : memref<8x1xf32, #tpu.memory_space<vmem>>, vector<8x1xf32>
    %3 = vector.broadcast %2 : vector<8x1xf32> to vector<8x128xf32>
    %4 = arith.mulf %1, %3 : vector<8x128xf32>
    %c0_4 = arith.constant 0 : index
    %c0_5 = arith.constant 0 : index
    %5 = vector.load %arg4[%c0_4, %c0_5] : memref<8x1xf32, #tpu.memory_space<vmem>>, vector<8x1xf32>
    %6 = vector.broadcast %5 : vector<8x1xf32> to vector<8x128xf32>
    %7 = arith.addf %4, %6 : vector<8x128xf32>
    %c0_6 = arith.constant 0 : index
    %c0_7 = arith.constant 0 : index
    %c0_8 = arith.constant 0 : index
    %8 = vector.load %arg5[%c0_6, %c0_7, %c0_8] : memref<1x8x128xf32, #tpu.memory_space<vmem>>, vector<1x8x128xf32>
    %9 = vector.shape_cast %8 : vector<1x8x128xf32> to vector<8x128xf32>
    %10 = vector.shape_cast %7 : vector<8x128xf32> to vector<1x8x128xf32>
    tpu.vector_store %arg5[%c0_6, %c0_7, %c0_8], %10 {strides = array<i32>} : memref<1x8x128xf32, #tpu.memory_space<vmem>>, vector<1x8x128xf32>,
    return
  }
  func.func @transform_0(%arg0: i32, %arg1: i32) -> (i32, i32, i32) {
    %c0_i32 = arith.constant 0 : i32
    %c0_i32_0 = arith.constant 0 : i32
    return %arg0, %c0_i32, %arg1 : i32, i32, i32
  }
  func.func @transform_1(%arg0: i32, %arg1: i32) -> (i32, i32) {
    %c0_i32 = arith.constant 0 : i32
    %c0_i32_0 = arith.constant 0 : i32
    %c0_i32_1 = arith.constant 0 : i32
    return %c0_i32, %c0_i32_0 : i32, i32
  }
  func.func @transform_2(%arg0: i32, %arg1: i32) -> (i32, i32) {
    %c0_i32 = arith.constant 0 : i32
    %c0_i32_0 = arith.constant 0 : i32
    %c0_i32_1 = arith.constant 0 : i32
    return %c0_i32, %c0_i32_0 : i32, i32
  }
  func.func @transform_3(%arg0: i32, %arg1: i32) -> (i32, i32, i32) {
    %c0_i32 = arith.constant 0 : i32
    %c0_i32_0 = arith.constant 0 : i32
    return %arg0, %c0_i32, %arg1 : i32, i32, i32
  }
}

</mosaic_0001>

<llo_original>
// kernel: con_block_forward.3
$region0: #{con_block_forward.3}
  #allocation0 [shape = 'u32[]', space=smem, size = 0x4, offset = 0x4, fixed_abs, tag = 'smem constant byte address 0x4 - core index']
  #allocation1 [shape = 'u32[144,128]{1,0:T(1,128)}', space=vmem, size = 0x12000, scoped, tag = 'internal scratch']
  %s0 = inlined_call_operand.vmem [shape: f32[2,8,256], index: 0, kind: input, shape index: {}]
  %s1 = inlined_call_operand.vmem [shape: f32[8,1], index: 1, kind: input, shape index: {}]
  %s2 = inlined_call_operand.vmem [shape: f32[8,1], index: 2, kind: input, shape index: {}]
  %s3 = inlined_call_operand.vmem [shape: f32[2,8,256], index: 3, kind: output, shape index: {}]
  %s4 = sld [smem:[#allocation0]]
  $region45: #{con_block_forward.3} parent=0
    _
  %s6 = ssub.s32 1, %s4
  %s7 = scalar_select 0, %s6, %s4
  loop: start=0, step=1, limit=6
  $region2: #{con_block_forward.3} parent=0 // loop_pre_header
    _
  $region3: #{con_block_forward.3} parent=0 // loop_header
    %s9 = sphi 0, %s13
    %p10 = scmp.ge.s32.totalorder %s9, 6
    %s16 = sphi 0, %s28
    %s17 = sphi 0, %s24
    %s18 = sphi 0, %s16
    %s19 = sphi 0, %s17
    %s20 = sphi 0, %s18
    %s21 = sphi 0, %s19
    %s33 = sphi 0, %s35
    %s36 = sphi 0, %s33
    %s37 = sphi 0, %s36
    %s53 = sphi 0, %s37
    %s57 = sphi 0, %s57
    %s59 = sphi 0, %s57
    %s60 = sphi 0, %s59
    %s74 = sphi 0, %s60
    %s78 = sphi 0, %s78
    %s80 = sphi 0, %s78
    %s81 = sphi 0, %s80
    %s95 = sphi 0, %s81
    %s103 = sphi 0, %s105
    %s106 = sphi 0, %s103
    %s107 = sphi 0, %s106
    %s123 = sphi 0, %s107
  $region4: #{con_block_forward.3} parent=0 // loop_header_branch
    %12 = sbr.rel (%p10) target = $region8
  $region5: #{con_block_forward.3} parent=0 // loop_body
    %s14 = ssub.s32 %s9, 1
    %s15 = ssub.s32 %s9, 2
    %s22 = sadd.s32 1, %s17
    %p23 = scmp.ge.s32.totalorder %s22, 2
    %s24 = scalar_select %p23, 0, %s22
    %s25 = sadd.s32 1, %s16
    %s26 = scalar_select %p23, %s25, %s16
    %p27 = scmp.ge.s32.totalorder %s26, 2
    %s28 = scalar_select %p27, 0, %s26
    %s29 = ssub.s32 %s16, %s28
    %s30 = ssub.s32 %s17, %s24
    %s31 = sor.u32 %s29, %s30
    %p32 = scmp.eq.s32.totalorder %s31, 0
    %s34 = sadd.s32 %s33, 1
    %s35 = scalar_select %p32, %s33, %s34
    %p38 = pneg %p32
    %p39 = scmp.eq.s32.totalorder %s9, 3
    %p40 = por %p38, %p39
    %p41 = scmp.ne.s32.totalorder %s33, %s36
    %p42 = scmp.eq.s32.totalorder %s9, 0
    %p43 = por %p41, %p42
    %p44 = scmp.ne.s32.totalorder %s33, %s36
    %p45 = scmp.eq.s32.totalorder %s14, 3
    %p46 = por %p44, %p45
    %p47 = scmp.ne.s32.totalorder %s36, %s37
    %p48 = scmp.eq.s32.totalorder %s14, 0
    %p49 = por %p47, %p48
    %p50 = scmp.ne.s32.totalorder %s36, %s37
    %p51 = scmp.eq.s32.totalorder %s15, 3
    %p52 = por %p50, %p51
    %p54 = scmp.ne.s32.totalorder %s37, %s53
    %p55 = scmp.eq.s32.totalorder %s15, 0
    %p56 = por %p54, %p55
    %s58 = sadd.s32 %s57, 1
    %p61 = scmp.eq.s32.totalorder %s9, 3
    %p62 = scmp.ne.s32.totalorder %s57, %s59
    %p63 = scmp.eq.s32.totalorder %s9, 0
    %p64 = por %p62, %p63
    %p65 = scmp.ne.s32.totalorder %s57, %s59
    %p66 = scmp.eq.s32.totalorder %s14, 3
    %p67 = por %p65, %p66
    %p68 = scmp.ne.s32.totalorder %s59, %s60
    %p69 = scmp.eq.s32.totalorder %s14, 0
    %p70 = por %p68, %p69
    %p71 = scmp.ne.s32.totalorder %s59, %s60
    %p72 = scmp.eq.s32.totalorder %s15, 3
    %p73 = por %p71, %p72
    %p75 = scmp.ne.s32.totalorder %s60, %s74
    %p76 = scmp.eq.s32.totalorder %s15, 0
    %p77 = por %p75, %p76
    %s79 = sadd.s32 %s78, 1
    %p82 = scmp.eq.s32.totalorder %s9, 3
    %p83 = scmp.ne.s32.totalorder %s78, %s80
    %p84 = scmp.eq.s32.totalorder %s9, 0
    %p85 = por %p83, %p84
    %p86 = scmp.ne.s32.totalorder %s78, %s80
    %p87 = scmp.eq.s32.totalorder %s14, 3
    %p88 = por %p86, %p87
    %p89 = scmp.ne.s32.totalorder %s80, %s81
    %p90 = scmp.eq.s32.totalorder %s14, 0
    %p91 = por %p89, %p90
    %p92 = scmp.ne.s32.totalorder %s80, %s81
    %p93 = scmp.eq.s32.totalorder %s15, 3
    %p94 = por %p92, %p93
    %p96 = scmp.ne.s32.totalorder %s81, %s95
    %p97 = scmp.eq.s32.totalorder %s15, 0
    %p98 = por %p96, %p97
    %s99 = ssub.s32 %s16, %s28
    %s100 = ssub.s32 %s17, %s24
    %s101 = sor.u32 %s99, %s100
    %p102 = scmp.eq.s32.totalorder %s101, 0
    %s104 = sadd.s32 %s103, 1
    %s105 = scalar_select %p102, %s103, %s104
    %p108 = pneg %p102
    %p109 = scmp.eq.s32.totalorder %s9, 3
    %p110 = por %p108, %p109
    %p111 = scmp.ne.s32.totalorder %s103, %s106
    %p112 = scmp.eq.s32.totalorder %s9, 0
    %p113 = por %p111, %p112
    %p114 = scmp.ne.s32.totalorder %s103, %s106
    %p115 = scmp.eq.s32.totalorder %s14, 3
    %p116 = por %p114, %p115
    %p117 = scmp.ne.s32.totalorder %s106, %s107
    %p118 = scmp.eq.s32.totalorder %s14, 0
    %p119 = por %p117, %p118
    %p120 = scmp.ne.s32.totalorder %s106, %s107
    %p121 = scmp.eq.s32.totalorder %s15, 3
    %p122 = por %p120, %p121
    %p124 = scmp.ne.s32.totalorder %s107, %s123
    %p125 = scmp.eq.s32.totalorder %s15, 0
    %p126 = por %p124, %p125
    %p127 = scmp.le.s32.totalorder 1, %s9
    %p128 = scmp.lt.s32.totalorder %s9, 5
    %p129 = pnand %p127, %p128
    %p130 = pneg %p129
    // Predicated region
    $region9: #{con_block_forward.3} parent=5 // pred_check
      _
    $region10: #{con_block_forward.3} parent=5 // pred_check_branch
      %132 = sbr.rel (%p129) target = $region12
    $region11: #{con_block_forward.3} parent=5 // pred_region
      %s133 = ssub.s32 %s9, 1
      // Predicated region
      $region13: #{con_block_forward.3} parent=11 // pred_check
        %p134 = pneg %p70
      $region14: #{con_block_forward.3} parent=11 // pred_check_branch
        %136 = sbr.rel (%p134) target = $region16
      $region15: #{con_block_forward.3} parent=11 // pred_region
        _
      $region16: #{con_block_forward.3} parent=11 // pred_fallthru
        _
      // Predicated region
      $region17: #{con_block_forward.3} parent=11 // pred_check
        %p137 = pneg %p91
      $region18: #{con_block_forward.3} parent=11 // pred_check_branch
        %139 = sbr.rel (%p137) target = $region20
      $region19: #{con_block_forward.3} parent=11 // pred_region
        _
      $region20: #{con_block_forward.3} parent=11 // pred_fallthru
        _
    $region12: #{con_block_forward.3} parent=5 // pred_fallthru
      _
    %p140 = scmp.lt.s32.totalorder %s9, 4
    // Predicated region
    $region21: #{con_block_forward.3} parent=5 // pred_check
      %p141 = pneg %p140
    $region22: #{con_block_forward.3} parent=5 // pred_check_branch
      %143 = sbr.rel (%p141) target = $region24
    $region23: #{con_block_forward.3} parent=5 // pred_region
      // Predicated region
      $region25: #{con_block_forward.3} parent=23 // pred_check
        %p144 = pneg %p43
      $region26: #{con_block_forward.3} parent=23 // pred_check_branch
        %146 = sbr.rel (%p144) target = $region28
      $region27: #{con_block_forward.3} parent=23 // pred_region
        %p147 = scmp.lt.s32.totalorder %s16, 1
        %s148 = scalar_select %p147, %s16, 1
        %p149 = scmp.lt.s32.totalorder %s17, 1
        %s150 = scalar_select %p149, %s17, 1
        %s151 = smul.addr %s148, 2
        %s152 = sadd.s32 %s150, %s151
        %s153 = smul.addr %s152, 8
        %s154 = scalar_lea.vmem %s0, %s153
      $region28: #{con_block_forward.3} parent=23 // pred_fallthru
        _
    $region24: #{con_block_forward.3} parent=5 // pred_fallthru
      _
    %p155 = scmp.le.s32.totalorder 1, %s9
    %p156 = scmp.lt.s32.totalorder %s9, 5
    %p157 = pnand %p155, %p156
    %p158 = pneg %p157
    // Predicated region
    $region29: #{con_block_forward.3} parent=5 // pred_check
      _
    $region30: #{con_block_forward.3} parent=5 // pred_check_branch
      %160 = sbr.rel (%p157) target = $region32
    $region31: #{con_block_forward.3} parent=5 // pred_region
      %s161 = ssub.s32 %s9, 1
      %p162 = scmp.lt.s32.totalorder %s18, 1
      %s163 = scalar_select %p162, %s18, 1
      %p164 = scmp.lt.s32.totalorder %s19, 1
      %s165 = scalar_select %p164, %s19, 1
      %s166 = smul.addr %s163, 2
      %s167 = sadd.s32 %s165, %s166
      %s168 = smul.addr %s167, 8
      %s169 = scalar_lea.vmem %s0, %s168
      %p170 = pneg %p49
      %p171 = pneg %p46
      %p172 = pneg %p70
      %p173 = pneg %p67
      %p174 = pneg %p91
      %p175 = pneg %p88
      %p176 = pneg %p119
      %p177 = pneg %p116
      %p178 = scmp.lt.s32.totalorder %s18, 1
      %s179 = scalar_select %p178, %s18, 1
      %p180 = scmp.lt.s32.totalorder %s19, 1
      %s181 = scalar_select %p180, %s19, 1
      %s182 = smul.addr %s179, 2
      %s183 = sadd.s32 %s181, %s182
      %s184 = smul.addr %s183, 8
      %s185 = scalar_lea.vmem %s3, %s184
      %p186 = scmp.lt.s32.totalorder %s18, 1
      %s187 = scalar_select %p186, %s18, 1
      %p188 = scmp.lt.s32.totalorder %s19, 1
      %s189 = scalar_select %p188, %s19, 1
      %s190 = smul.addr %s187, 2
      %s191 = sadd.s32 %s189, %s190
      %s192 = smul.addr %s191, 8
      %s193 = scalar_lea.vmem %s0, %s192
      %p194 = scmp.lt.s32.totalorder %s18, 1
      %s195 = scalar_select %p194, %s18, 1
      %p196 = scmp.lt.s32.totalorder %s19, 1
      %s197 = scalar_select %p196, %s19, 1
      %s198 = smul.addr %s195, 2
      %s199 = sadd.s32 %s197, %s198
      %s200 = smul.addr %s199, 8
      %s201 = scalar_lea.vmem %s3, %s200
      %v202 = vld [vmem:[%s193] sm:$0xff]
      %v203 = vld [vmem:[%s1] sm:$0xff]
      %205 = vset.pattern.permute.xlu0 0
      %206 = vperm.xlu0 %205, %v203
      %v207 = vpop.permute.xlu0 %206
      %v209 = vmul.f32 %v202, %v207
      %v210 = vld [vmem:[%s2] sm:$0xff]
      %212 = vset.pattern.permute.xlu0 0
      %213 = vperm.xlu0 %212, %v210
      %v214 = vpop.permute.xlu0 %213
      %v216 = vadd.f32 %v209, %v214
      %217 = vst [vmem:[%s201] sm:$0xff] %v216
      %p218 = scmp.lt.s32.totalorder %s18, 1
      %s219 = scalar_select %p218, %s18, 1
      %p220 = scmp.lt.s32.totalorder %s19, 1
      %s221 = scalar_select %p220, %s19, 1
      %s222 = smul.addr %s219, 2
      %s223 = sadd.s32 %s221, %s222
      %s224 = smul.addr %s223, 8
      %s225 = scalar_lea.vmem %s3, %s224
      // Predicated region
      $region33: #{con_block_forward.3} parent=31 // pred_check
        %p226 = pneg %p116
      $region34: #{con_block_forward.3} parent=31 // pred_check_branch
        %228 = sbr.rel (%p226) target = $region36
      $region35: #{con_block_forward.3} parent=31 // pred_region
        _
      $region36: #{con_block_forward.3} parent=31 // pred_fallthru
        _
    $region32: #{con_block_forward.3} parent=5 // pred_fallthru
      _
    %p229 = scmp.le.s32.totalorder 2, %s9
    // Predicated region
    $region37: #{con_block_forward.3} parent=5 // pred_check
      %p230 = pneg %p229
    $region38: #{con_block_forward.3} parent=5 // pred_check_branch
      %232 = sbr.rel (%p230) target = $region40
    $region39: #{con_block_forward.3} parent=5 // pred_region
      %s233 = ssub.s32 %s9, 2
      // Predicated region
      $region41: #{con_block_forward.3} parent=39 // pred_check
        %p234 = pneg %p122
      $region42: #{con_block_forward.3} parent=39 // pred_check_branch
        %236 = sbr.rel (%p234) target = $region44
      $region43: #{con_block_forward.3} parent=39 // pred_region
        %p237 = scmp.lt.s32.totalorder %s20, 1
        %s238 = scalar_select %p237, %s20, 1
        %p239 = scmp.lt.s32.totalorder %s21, 1
        %s240 = scalar_select %p239, %s21, 1
        %s241 = smul.addr %s238, 2
        %s242 = sadd.s32 %s240, %s241
        %s243 = smul.addr %s242, 8
        %s244 = scalar_lea.vmem %s3, %s243
      $region44: #{con_block_forward.3} parent=39 // pred_fallthru
        _
    $region40: #{con_block_forward.3} parent=5 // pred_fallthru
      _
  $region6: #{con_block_forward.3} parent=0 // loop_footer
    %s13 = sadd.s32 1, %s9
  $region7: #{con_block_forward.3} parent=0 // loop_footer_branch
    %8 = sbr.rel target = $region3
  $region8: #{con_block_forward.3} parent=0 // loop_exit
    _

// kernel: con_block_forward.2
$region0: #{con_block_forward.2}
  #allocation0 [shape = 'u32[]', space=smem, size = 0x4, offset = 0x4, fixed_abs, tag = 'smem constant byte address 0x4 - core index']
  #allocation1 [shape = 'u32[144,128]{1,0:T(1,128)}', space=vmem, size = 0x12000, scoped, tag = 'internal scratch']
  #allocation2 [shape = 'f32[160,12]{1,0:T(8,128)}', space=vmem, size = 0x14000, scoped, tag = 'scratch operand']
  %s0 = inlined_call_operand.vmem [shape: f32[2,288,12], index: 0, kind: input, shape index: {}, may-alias: {0,1,2}]
  %s1 = inlined_call_operand.vmem [shape: f32[2,288,12], index: 1, kind: input, shape index: {}, may-alias: {0,1,2}]
  %s2 = inlined_call_operand.vmem [shape: f32[2,288,12], index: 2, kind: input, shape index: {}, may-alias: {0,1,2}]
  %s3 = inlined_call_operand.vmem [shape: f32[3,8,12], index: 3, kind: input, shape index: {}]
  %s4 = inlined_call_operand.vmem [shape: f32[8,1], index: 4, kind: input, shape index: {}]
  %s5 = inlined_call_operand.vmem [shape: f32[2,8,256], index: 5, kind: output, shape index: {0}]
  %s6 = inlined_call_operand.vmem [shape: f32[2,2,8,1], index: 6, kind: output, shape index: {1}]
  %s7 = inlined_call_operand.vmem [shape: f32[2,2,8,1], index: 7, kind: output, shape index: {2}]
  %8 = xla_tuple %s5, %s6, %s7
  %s9 = sld [smem:[#allocation0]]
  $region69: #{con_block_forward.2} parent=0
    _
  %s11 = ssub.s32 1, %s9
  %s12 = scalar_select 0, %s11, %s9
  loop: start=0, step=1, limit=6
  $region2: #{con_block_forward.2} parent=0 // loop_pre_header
    _
  $region3: #{con_block_forward.2} parent=0 // loop_header
    %s14 = sphi 0, %s18
    %p15 = scmp.ge.s32.totalorder %s14, 6
    %s21 = sphi 0, %s33
    %s22 = sphi 0, %s29
    %s23 = sphi 0, %s21
    %s24 = sphi 0, %s22
    %s25 = sphi 0, %s23
    %s26 = sphi 0, %s24
    %s38 = sphi 0, %s40
    %s41 = sphi 0, %s38
    %s42 = sphi 0, %s41
    %s58 = sphi 0, %s42
    %s70 = sphi 0, %s72
    %s73 = sphi 0, %s70
    %s74 = sphi 0, %s73
    %s90 = sphi 0, %s74
    %s104 = sphi 0, %s106
    %s107 = sphi 0, %s104
    %s108 = sphi 0, %s107
    %s124 = sphi 0, %s108
    %s128 = sphi 0, %s128
    %s130 = sphi 0, %s128
    %s131 = sphi 0, %s130
    %s145 = sphi 0, %s131
    %s149 = sphi 0, %s149
    %s151 = sphi 0, %s149
    %s152 = sphi 0, %s151
    %s166 = sphi 0, %s152
    %s174 = sphi 0, %s176
    %s177 = sphi 0, %s174
    %s178 = sphi 0, %s177
    %s194 = sphi 0, %s178
    %s202 = sphi 0, %s204
    %s205 = sphi 0, %s202
    %s206 = sphi 0, %s205
    %s222 = sphi 0, %s206
    %s230 = sphi 0, %s232
    %s233 = sphi 0, %s230
    %s234 = sphi 0, %s233
    %s250 = sphi 0, %s234
  $region4: #{con_block_forward.2} parent=0 // loop_header_branch
    %17 = sbr.rel (%p15) target = $region8
  $region5: #{con_block_forward.2} parent=0 // loop_body
    %s19 = ssub.s32 %s14, 1
    %s20 = ssub.s32 %s14, 2
    %s27 = sadd.s32 1, %s22
    %p28 = scmp.ge.s32.totalorder %s27, 2
    %s29 = scalar_select %p28, 0, %s27
    %s30 = sadd.s32 1, %s21
    %s31 = scalar_select %p28, %s30, %s21
    %p32 = scmp.ge.s32.totalorder %s31, 2
    %s33 = scalar_select %p32, 0, %s31
    %s34 = ssub.s32 %s21, %s33
    %s35 = ssub.s32 %s22, %s29
    %s36 = sor.u32 %s34, %s35
    %p37 = scmp.eq.s32.totalorder %s36, 0
    %s39 = sadd.s32 %s38, 1
    %s40 = scalar_select %p37, %s38, %s39
    %p43 = pneg %p37
    %p44 = scmp.eq.s32.totalorder %s14, 3
    %p45 = por %p43, %p44
    %p46 = scmp.ne.s32.totalorder %s38, %s41
    %p47 = scmp.eq.s32.totalorder %s14, 0
    %p48 = por %p46, %p47
    %p49 = scmp.ne.s32.totalorder %s38, %s41
    %p50 = scmp.eq.s32.totalorder %s19, 3
    %p51 = por %p49, %p50
    %p52 = scmp.ne.s32.totalorder %s41, %s42
    %p53 = scmp.eq.s32.totalorder %s19, 0
    %p54 = por %p52, %p53
    %p55 = scmp.ne.s32.totalorder %s41, %s42
    %p56 = scmp.eq.s32.totalorder %s20, 3
    %p57 = por %p55, %p56
    %p59 = scmp.ne.s32.totalorder %s42, %s58
    %p60 = scmp.eq.s32.totalorder %s20, 0
    %p61 = por %p59, %p60
    %s62 = sadd.s32 %s22, 1
    %s63 = smul.u32 %s62, 8
    %s64 = sadd.s32 %s29, 1
    %s65 = smul.u32 %s64, 8
    %s66 = ssub.s32 %s21, %s33
    %s67 = ssub.s32 %s63, %s65
    %s68 = sor.u32 %s66, %s67
    %p69 = scmp.eq.s32.totalorder %s68, 0
    %s71 = sadd.s32 %s70, 1
    %s72 = scalar_select %p69, %s70, %s71
    %p75 = pneg %p69
    %p76 = scmp.eq.s32.totalorder %s14, 3
    %p77 = por %p75, %p76
    %p78 = scmp.ne.s32.totalorder %s70, %s73
    %p79 = scmp.eq.s32.totalorder %s14, 0
    %p80 = por %p78, %p79
    %p81 = scmp.ne.s32.totalorder %s70, %s73
    %p82 = scmp.eq.s32.totalorder %s19, 3
    %p83 = por %p81, %p82
    %p84 = scmp.ne.s32.totalorder %s73, %s74
    %p85 = scmp.eq.s32.totalorder %s19, 0
    %p86 = por %p84, %p85
    %p87 = scmp.ne.s32.totalorder %s73, %s74
    %p88 = scmp.eq.s32.totalorder %s20, 3
    %p89 = por %p87, %p88
    %p91 = scmp.ne.s32.totalorder %s74, %s90
    %p92 = scmp.eq.s32.totalorder %s20, 0
    %p93 = por %p91, %p92
    %s94 = sadd.s32 %s22, 1
    %s95 = smul.u32 %s94, 8
    %s96 = sadd.s32 %s95, 1
    %s97 = sadd.s32 %s29, 1
    %s98 = smul.u32 %s97, 8
    %s99 = sadd.s32 %s98, 1
    %s100 = ssub.s32 %s21, %s33
    %s101 = ssub.s32 %s96, %s99
    %s102 = sor.u32 %s100, %s101
    %p103 = scmp.eq.s32.totalorder %s102, 0
    %s105 = sadd.s32 %s104, 1
    %s106 = scalar_select %p103, %s104, %s105
    %p109 = pneg %p103
    %p110 = scmp.eq.s32.totalorder %s14, 3
    %p111 = por %p109, %p110
    %p112 = scmp.ne.s32.totalorder %s104, %s107
    %p113 = scmp.eq.s32.totalorder %s14, 0
    %p114 = por %p112, %p113
    %p115 = scmp.ne.s32.totalorder %s104, %s107
    %p116 = scmp.eq.s32.totalorder %s19, 3
    %p117 = por %p115, %p116
    %p118 = scmp.ne.s32.totalorder %s107, %s108
    %p119 = scmp.eq.s32.totalorder %s19, 0
    %p120 = por %p118, %p119
    %p121 = scmp.ne.s32.totalorder %s107, %s108
    %p122 = scmp.eq.s32.totalorder %s20, 3
    %p123 = por %p121, %p122
    %p125 = scmp.ne.s32.totalorder %s108, %s124
    %p126 = scmp.eq.s32.totalorder %s20, 0
    %p127 = por %p125, %p126
    %s129 = sadd.s32 %s128, 1
    %p132 = scmp.eq.s32.totalorder %s14, 3
    %p133 = scmp.ne.s32.totalorder %s128, %s130
    %p134 = scmp.eq.s32.totalorder %s14, 0
    %p135 = por %p133, %p134
    %p136 = scmp.ne.s32.totalorder %s128, %s130
    %p137 = scmp.eq.s32.totalorder %s19, 3
    %p138 = por %p136, %p137
    %p139 = scmp.ne.s32.totalorder %s130, %s131
    %p140 = scmp.eq.s32.totalorder %s19, 0
    %p141 = por %p139, %p140
    %p142 = scmp.ne.s32.totalorder %s130, %s131
    %p143 = scmp.eq.s32.totalorder %s20, 3
    %p144 = por %p142, %p143
    %p146 = scmp.ne.s32.totalorder %s131, %s145
    %p147 = scmp.eq.s32.totalorder %s20, 0
    %p148 = por %p146, %p147
    %s150 = sadd.s32 %s149, 1
    %p153 = scmp.eq.s32.totalorder %s14, 3
    %p154 = scmp.ne.s32.totalorder %s149, %s151
    %p155 = scmp.eq.s32.totalorder %s14, 0
    %p156 = por %p154, %p155
    %p157 = scmp.ne.s32.totalorder %s149, %s151
    %p158 = scmp.eq.s32.totalorder %s19, 3
    %p159 = por %p157, %p158
    %p160 = scmp.ne.s32.totalorder %s151, %s152
    %p161 = scmp.eq.s32.totalorder %s19, 0
    %p162 = por %p160, %p161
    %p163 = scmp.ne.s32.totalorder %s151, %s152
    %p164 = scmp.eq.s32.totalorder %s20, 3
    %p165 = por %p163, %p164
    %p167 = scmp.ne.s32.totalorder %s152, %s166
    %p168 = scmp.eq.s32.totalorder %s20, 0
    %p169 = por %p167, %p168
    %s170 = ssub.s32 %s21, %s33
    %s171 = ssub.s32 %s22, %s29
    %s172 = sor.u32 %s170, %s171
    %p173 = scmp.eq.s32.totalorder %s172, 0
    %s175 = sadd.s32 %s174, 1
    %s176 = scalar_select %p173, %s174, %s175
    %p179 = pneg %p173
    %p180 = scmp.eq.s32.totalorder %s14, 3
    %p181 = por %p179, %p180
    %p182 = scmp.ne.s32.totalorder %s174, %s177
    %p183 = scmp.eq.s32.totalorder %s14, 0
    %p184 = por %p182, %p183
    %p185 = scmp.ne.s32.totalorder %s174, %s177
    %p186 = scmp.eq.s32.totalorder %s19, 3
    %p187 = por %p185, %p186
    %p188 = scmp.ne.s32.totalorder %s177, %s178
    %p189 = scmp.eq.s32.totalorder %s19, 0
    %p190 = por %p188, %p189
    %p191 = scmp.ne.s32.totalorder %s177, %s178
    %p192 = scmp.eq.s32.totalorder %s20, 3
    %p193 = por %p191, %p192
    %p195 = scmp.ne.s32.totalorder %s178, %s194
    %p196 = scmp.eq.s32.totalorder %s20, 0
    %p197 = por %p195, %p196
    %s198 = ssub.s32 %s21, %s33
    %s199 = ssub.s32 %s22, %s29
    %s200 = sor.u32 %s198, %s199
    %p201 = scmp.eq.s32.totalorder %s200, 0
    %s203 = sadd.s32 %s202, 1
    %s204 = scalar_select %p201, %s202, %s203
    %p207 = pneg %p201
    %p208 = scmp.eq.s32.totalorder %s14, 3
    %p209 = por %p207, %p208
    %p210 = scmp.ne.s32.totalorder %s202, %s205
    %p211 = scmp.eq.s32.totalorder %s14, 0
    %p212 = por %p210, %p211
    %p213 = scmp.ne.s32.totalorder %s202, %s205
    %p214 = scmp.eq.s32.totalorder %s19, 3
    %p215 = por %p213, %p214
    %p216 = scmp.ne.s32.totalorder %s205, %s206
    %p217 = scmp.eq.s32.totalorder %s19, 0
    %p218 = por %p216, %p217
    %p219 = scmp.ne.s32.totalorder %s205, %s206
    %p220 = scmp.eq.s32.totalorder %s20, 3
    %p221 = por %p219, %p220
    %p223 = scmp.ne.s32.totalorder %s206, %s222
    %p224 = scmp.eq.s32.totalorder %s20, 0
    %p225 = por %p223, %p224
    %s226 = ssub.s32 %s21, %s33
    %s227 = ssub.s32 %s22, %s29
    %s228 = sor.u32 %s226, %s227
    %p229 = scmp.eq.s32.totalorder %s228, 0
    %s231 = sadd.s32 %s230, 1
    %s232 = scalar_select %p229, %s230, %s231
    %p235 = pneg %p229
    %p236 = scmp.eq.s32.totalorder %s14, 3
    %p237 = por %p235, %p236
    %p238 = scmp.ne.s32.totalorder %s230, %s233
    %p239 = scmp.eq.s32.totalorder %s14, 0
    %p240 = por %p238, %p239
    %p241 = scmp.ne.s32.totalorder %s230, %s233
    %p242 = scmp.eq.s32.totalorder %s19, 3
    %p243 = por %p241, %p242
    %p244 = scmp.ne.s32.totalorder %s233, %s234
    %p245 = scmp.eq.s32.totalorder %s19, 0
    %p246 = por %p244, %p245
    %p247 = scmp.ne.s32.totalorder %s233, %s234
    %p248 = scmp.eq.s32.totalorder %s20, 3
    %p249 = por %p247, %p248
    %p251 = scmp.ne.s32.totalorder %s234, %s250
    %p252 = scmp.eq.s32.totalorder %s20, 0
    %p253 = por %p251, %p252
    %p254 = scmp.le.s32.totalorder 1, %s14
    %p255 = scmp.lt.s32.totalorder %s14, 5
    %p256 = pnand %p254, %p255
    %p257 = pneg %p256
    // Predicated region
    $region9: #{con_block_forward.2} parent=5 // pred_check
      _
    $region10: #{con_block_forward.2} parent=5 // pred_check_branch
      %259 = sbr.rel (%p256) target = $region12
    $region11: #{con_block_forward.2} parent=5 // pred_region
      %s260 = ssub.s32 %s14, 1
      // Predicated region
      $region13: #{con_block_forward.2} parent=11 // pred_check
        %p261 = pneg %p141
      $region14: #{con_block_forward.2} parent=11 // pred_check_branch
        %263 = sbr.rel (%p261) target = $region16
      $region15: #{con_block_forward.2} parent=11 // pred_region
        _
      $region16: #{con_block_forward.2} parent=11 // pred_fallthru
        _
      // Predicated region
      $region17: #{con_block_forward.2} parent=11 // pred_check
        %p264 = pneg %p162
      $region18: #{con_block_forward.2} parent=11 // pred_check_branch
        %266 = sbr.rel (%p264) target = $region20
      $region19: #{con_block_forward.2} parent=11 // pred_region
        _
      $region20: #{con_block_forward.2} parent=11 // pred_fallthru
        _
    $region12: #{con_block_forward.2} parent=5 // pred_fallthru
      _
    %p267 = scmp.lt.s32.totalorder %s14, 4
    // Predicated region
    $region21: #{con_block_forward.2} parent=5 // pred_check
      %p268 = pneg %p267
    $region22: #{con_block_forward.2} parent=5 // pred_check_branch
      %270 = sbr.rel (%p268) target = $region24
    $region23: #{con_block_forward.2} parent=5 // pred_region
      // Predicated region
      $region25: #{con_block_forward.2} parent=23 // pred_check
        %p271 = pneg %p48
      $region26: #{con_block_forward.2} parent=23 // pred_check_branch
        %273 = sbr.rel (%p271) target = $region28
      $region27: #{con_block_forward.2} parent=23 // pred_region
        %s274 = smul.u32 16, %s22
        %s275 = ssub.s32 36, %s274
        %p276 = scmp.lt.s32.totalorder %s275, 16
        %s277 = scalar_select %p276, %s275, 16
        %s278 = smul.u32 128, %s277
        %p279 = scmp.lt.s32.totalorder %s21, 1
        %s280 = scalar_select %p279, %s21, 1
        %p281 = scmp.lt.s32.totalorder %s274, 35
        %s282 = scalar_select %p281, %s274, 35
        %s283 = smul.addr %s280, 36
        %s284 = sadd.s32 %s282, %s283
        %s285 = smul.addr %s284, 8
        %s286 = scalar_lea.vmem %s0, %s285
        %s287 = smul.u32 16, %s22
        %s288 = ssub.s32 36, %s287
        %p289 = scmp.lt.s32.totalorder %s288, 16
        %s290 = scalar_select %p289, %s288, 16
        %s291 = smul.u32 128, %s290
      $region28: #{con_block_forward.2} parent=23 // pred_fallthru
        _
      // Predicated region
      $region29: #{con_block_forward.2} parent=23 // pred_check
        %p292 = pneg %p80
      $region30: #{con_block_forward.2} parent=23 // pred_check_branch
        %294 = sbr.rel (%p292) target = $region32
      $region31: #{con_block_forward.2} parent=23 // pred_region
        %s295 = sadd.s32 %s22, 1
        %s296 = smul.u32 %s295, 8
        %s297 = smul.u32 2, %s296
        %p298 = scmp.lt.s32.totalorder %s21, 1
        %s299 = scalar_select %p298, %s21, 1
        %p300 = scmp.lt.s32.totalorder %s297, 35
        %s301 = scalar_select %p300, %s297, 35
        %s302 = smul.addr %s299, 36
        %s303 = sadd.s32 %s301, %s302
        %s304 = smul.addr %s303, 8
        %s305 = scalar_lea.vmem %s1, %s304
        %s306 = sadd.s32 %s22, 1
        %s307 = smul.u32 %s306, 8
        %s308 = smul.u32 2, %s307
      $region32: #{con_block_forward.2} parent=23 // pred_fallthru
        _
      // Predicated region
      $region33: #{con_block_forward.2} parent=23 // pred_check
        %p309 = pneg %p114
      $region34: #{con_block_forward.2} parent=23 // pred_check_branch
        %311 = sbr.rel (%p309) target = $region36
      $region35: #{con_block_forward.2} parent=23 // pred_region
        %s312 = sadd.s32 %s22, 1
        %s313 = smul.u32 %s312, 8
        %s314 = sadd.s32 %s313, 1
        %s315 = smul.u32 2, %s314
        %p316 = scmp.lt.s32.totalorder %s21, 1
        %s317 = scalar_select %p316, %s21, 1
        %p318 = scmp.lt.s32.totalorder %s315, 35
        %s319 = scalar_select %p318, %s315, 35
        %s320 = smul.addr %s317, 36
        %s321 = sadd.s32 %s319, %s320
        %s322 = smul.addr %s321, 8
        %s323 = scalar_lea.vmem %s2, %s322
        %s324 = sadd.s32 %s22, 1
        %s325 = smul.u32 %s324, 8
        %s326 = sadd.s32 %s325, 1
        %s327 = smul.u32 2, %s326
      $region36: #{con_block_forward.2} parent=23 // pred_fallthru
        _
    $region24: #{con_block_forward.2} parent=5 // pred_fallthru
      _
    %p328 = scmp.le.s32.totalorder 1, %s14
    %p329 = scmp.lt.s32.totalorder %s14, 5
    %p330 = pnand %p328, %p329
    %p331 = pneg %p330
    // Predicated region
    $region37: #{con_block_forward.2} parent=5 // pred_check
      _
    $region38: #{con_block_forward.2} parent=5 // pred_check_branch
      %333 = sbr.rel (%p330) target = $region40
    $region39: #{con_block_forward.2} parent=5 // pred_region
      %s334 = ssub.s32 %s14, 1
      %s335 = smul.u32 16, %s24
      %s336 = ssub.s32 36, %s335
      %p337 = scmp.lt.s32.totalorder %s336, 16
      %s338 = scalar_select %p337, %s336, 16
      %s339 = smul.u32 128, %s338
      %p340 = scmp.lt.s32.totalorder %s23, 1
      %s341 = scalar_select %p340, %s23, 1
      %p342 = scmp.lt.s32.totalorder %s335, 35
      %s343 = scalar_select %p342, %s335, 35
      %s344 = smul.addr %s341, 36
      %s345 = sadd.s32 %s343, %s344
      %s346 = smul.addr %s345, 8
      %s347 = scalar_lea.vmem %s0, %s346
      %p348 = pneg %p54
      %p349 = pneg %p51
      %s350 = sadd.s32 %s24, 1
      %s351 = smul.u32 %s350, 8
      %s352 = smul.u32 2, %s351
      %p353 = scmp.lt.s32.totalorder %s23, 1
      %s354 = scalar_select %p353, %s23, 1
      %p355 = scmp.lt.s32.totalorder %s352, 35
      %s356 = scalar_select %p355, %s352, 35
      %s357 = smul.addr %s354, 36
      %s358 = sadd.s32 %s356, %s357
      %s359 = smul.addr %s358, 8
      %s360 = scalar_lea.vmem %s1, %s359
      %p361 = pneg %p86
      %p362 = pneg %p83
      %s363 = sadd.s32 %s24, 1
      %s364 = smul.u32 %s363, 8
      %s365 = sadd.s32 %s364, 1
      %s366 = smul.u32 2, %s365
      %p367 = scmp.lt.s32.totalorder %s23, 1
      %s368 = scalar_select %p367, %s23, 1
      %p369 = scmp.lt.s32.totalorder %s366, 35
      %s370 = scalar_select %p369, %s366, 35
      %s371 = smul.addr %s368, 36
      %s372 = sadd.s32 %s370, %s371
      %s373 = smul.addr %s372, 8
      %s374 = scalar_lea.vmem %s2, %s373
      %p375 = pneg %p120
      %p376 = pneg %p117
      %p377 = pneg %p141
      %p378 = pneg %p138
      %p379 = pneg %p162
      %p380 = pneg %p159
      %p381 = pneg %p190
      %p382 = pneg %p187
      %p383 = scmp.lt.s32.totalorder %s23, 1
      %s384 = scalar_select %p383, %s23, 1
      %p385 = scmp.lt.s32.totalorder %s24, 1
      %s386 = scalar_select %p385, %s24, 1
      %s387 = smul.addr %s384, 2
      %s388 = sadd.s32 %s386, %s387
      %s389 = smul.addr %s388, 8
      %s390 = scalar_lea.vmem %s5, %s389
      %p391 = pneg %p218
      %p392 = pneg %p215
      %p393 = scmp.lt.s32.totalorder %s23, 1
      %s394 = scalar_select %p393, %s23, 1
      %p395 = scmp.lt.s32.totalorder %s24, 1
      %s396 = scalar_select %p395, %s24, 1
      %s397 = smul.addr %s394, 2
      %s398 = sadd.s32 %s396, %s397
      %s399 = smul.addr %s398, 8
      %s400 = scalar_lea.vmem %s6, %s399
      %p401 = pneg %p246
      %p402 = pneg %p243
      %p403 = scmp.lt.s32.totalorder %s23, 1
      %s404 = scalar_select %p403, %s23, 1
      %p405 = scmp.lt.s32.totalorder %s24, 1
      %s406 = scalar_select %p405, %s24, 1
      %s407 = smul.addr %s404, 2
      %s408 = sadd.s32 %s406, %s407
      %s409 = smul.addr %s408, 8
      %s410 = scalar_lea.vmem %s7, %s409
      %s411 = smul.u32 16, %s24
      %s412 = ssub.s32 36, %s411
      %p413 = scmp.lt.s32.totalorder %s412, 16
      %s414 = scalar_select %p413, %s412, 16
      %s415 = smul.u32 128, %s414
      %p416 = scmp.lt.s32.totalorder %s23, 1
      %s417 = scalar_select %p416, %s23, 1
      %p418 = scmp.lt.s32.totalorder %s411, 35
      %s419 = scalar_select %p418, %s411, 35
      %s420 = smul.addr %s417, 36
      %s421 = sadd.s32 %s419, %s420
      %s422 = smul.addr %s421, 8
      %s423 = scalar_lea.vmem %s0, %s422
      %s424 = smul.u32 16, %s24
      %s425 = ssub.s32 36, %s424
      %p426 = scmp.lt.s32.totalorder %s425, 16
      %s427 = scalar_select %p426, %s425, 16
      %s428 = smul.u32 128, %s427
      %s429 = sadd.s32 %s24, 1
      %s430 = smul.u32 %s429, 8
      %s431 = smul.u32 2, %s430
      %p432 = scmp.lt.s32.totalorder %s23, 1
      %s433 = scalar_select %p432, %s23, 1
      %p434 = scmp.lt.s32.totalorder %s431, 35
      %s435 = scalar_select %p434, %s431, 35
      %s436 = smul.addr %s433, 36
      %s437 = sadd.s32 %s435, %s436
      %s438 = smul.addr %s437, 8
      %s439 = scalar_lea.vmem %s1, %s438
      %s440 = sadd.s32 %s24, 1
      %s441 = smul.u32 %s440, 8
      %s442 = smul.u32 2, %s441
      %s443 = sadd.s32 %s24, 1
      %s444 = smul.u32 %s443, 8
      %s445 = sadd.s32 %s444, 1
      %s446 = smul.u32 2, %s445
      %p447 = scmp.lt.s32.totalorder %s23, 1
      %s448 = scalar_select %p447, %s23, 1
      %p449 = scmp.lt.s32.totalorder %s446, 35
      %s450 = scalar_select %p449, %s446, 35
      %s451 = smul.addr %s448, 36
      %s452 = sadd.s32 %s450, %s451
      %s453 = smul.addr %s452, 8
      %s454 = scalar_lea.vmem %s2, %s453
      %s455 = sadd.s32 %s24, 1
      %s456 = smul.u32 %s455, 8
      %s457 = sadd.s32 %s456, 1
      %s458 = smul.u32 2, %s457
      %p459 = scmp.lt.s32.totalorder %s23, 1
      %s460 = scalar_select %p459, %s23, 1
      %p461 = scmp.lt.s32.totalorder %s24, 1
      %s462 = scalar_select %p461, %s24, 1
      %s463 = smul.addr %s460, 2
      %s464 = sadd.s32 %s462, %s463
      %s465 = smul.addr %s464, 8
      %s466 = scalar_lea.vmem %s5, %s465
      %p467 = scmp.lt.s32.totalorder %s23, 1
      %s468 = scalar_select %p467, %s23, 1
      %p469 = scmp.lt.s32.totalorder %s24, 1
      %s470 = scalar_select %p469, %s24, 1
      %s471 = smul.addr %s468, 2
      %s472 = sadd.s32 %s470, %s471
      %s473 = smul.addr %s472, 8
      %s474 = scalar_lea.vmem %s6, %s473
      %p475 = scmp.lt.s32.totalorder %s23, 1
      %s476 = scalar_select %p475, %s23, 1
      %p477 = scmp.lt.s32.totalorder %s24, 1
      %s478 = scalar_select %p477, %s24, 1
      %s479 = smul.addr %s476, 2
      %s480 = sadd.s32 %s478, %s479
      %s481 = smul.addr %s480, 8
      %s482 = scalar_lea.vmem %s7, %s481
      %v483 = vld [vmem:[%s423] sm:$0xff]
      %v484 = vld [vmem:[%s423 + $0x8] sm:$0xff]
      %v485 = vld [vmem:[%s423 + $0x10] sm:$0xff]
      %v486 = vld [vmem:[%s423 + $0x18] sm:$0xff]
      %v487 = vld [vmem:[%s423 + $0x20] sm:$0xff]
      %v488 = vld [vmem:[%s423 + $0x28] sm:$0xff]
      %v489 = vld [vmem:[%s423 + $0x30] sm:$0xff]
      %v490 = vld [vmem:[%s423 + $0x38] sm:$0xff]
      %v491 = vld [vmem:[%s423 + $0x40] sm:$0xff]
      %v492 = vld [vmem:[%s423 + $0x48] sm:$0xff]
      %v493 = vld [vmem:[%s423 + $0x50] sm:$0xff]
      %v494 = vld [vmem:[%s423 + $0x58] sm:$0xff]
      %v495 = vld [vmem:[%s423 + $0x60] sm:$0xff]
      %v496 = vld [vmem:[%s423 + $0x68] sm:$0xff]
      %v497 = vld [vmem:[%s423 + $0x70] sm:$0xff]
      %v498 = vld [vmem:[%s423 + $0x78] sm:$0xff]
      %vm499 = vcmask 97280
      %500 = vst.msk [vmem:[#allocation2] sm:$0xff] %vm499, %v483
      %501 = vst.msk [vmem:[#allocation2 + $0x8] sm:$0xff] %vm499, %v484
      %502 = vst.msk [vmem:[#allocation2 + $0x10] sm:$0xff] %vm499, %v485
      %503 = vst.msk [vmem:[#allocation2 + $0x18] sm:$0xff] %vm499, %v486
      %504 = vst.msk [vmem:[#allocation2 + $0x20] sm:$0xff] %vm499, %v487
      %505 = vst.msk [vmem:[#allocation2 + $0x28] sm:$0xff] %vm499, %v488
      %506 = vst.msk [vmem:[#allocation2 + $0x30] sm:$0xff] %vm499, %v489
      %507 = vst.msk [vmem:[#allocation2 + $0x38] sm:$0xff] %vm499, %v490
      %508 = vst.msk [vmem:[#allocation2 + $0x40] sm:$0xff] %vm499, %v491
      %509 = vst.msk [vmem:[#allocation2 + $0x48] sm:$0xff] %vm499, %v492
      %510 = vst.msk [vmem:[#allocation2 + $0x50] sm:$0xff] %vm499, %v493
      %511 = vst.msk [vmem:[#allocation2 + $0x58] sm:$0xff] %vm499, %v494
      %512 = vst.msk [vmem:[#allocation2 + $0x60] sm:$0xff] %vm499, %v495
      %513 = vst.msk [vmem:[#allocation2 + $0x68] sm:$0xff] %vm499, %v496
      %514 = vst.msk [vmem:[#allocation2 + $0x70] sm:$0xff] %vm499, %v497
      %515 = vst.msk [vmem:[#allocation2 + $0x78] sm:$0xff] %vm499, %v498
      %v516 = vld [vmem:[%s439] sm:$0xff]
      %v517 = vld [vmem:[%s439 + $0x8] sm:$0xff]
      %518 = vst.msk [vmem:[#allocation2 + $0x80] sm:$0xff] %vm499, %v516
      %519 = vst.msk [vmem:[#allocation2 + $0x88] sm:$0xff] %vm499, %v517
      %v520 = vld [vmem:[%s454] sm:$0xff]
      %v521 = vld [vmem:[%s454 + $0x8] sm:$0xff]
      %522 = vst.msk [vmem:[#allocation2 + $0x90] sm:$0xff] %vm499, %v520
      %523 = vst.msk [vmem:[#allocation2 + $0x98] sm:$0xff] %vm499, %v521
      %v524 = vld [vmem:[#allocation2] sm:$0xff]
      %v525 = vld [vmem:[#allocation2 + $0x8] sm:$0xff]
      %v526 = vld [vmem:[#allocation2 + $0x10] sm:$0xff]
      %v527 = vld [vmem:[#allocation2 + $0x18] sm:$0xff]
      %v528 = vld [vmem:[#allocation2 + $0x20] sm:$0xff]
      %v529 = vld [vmem:[#allocation2 + $0x28] sm:$0xff]
      %v530 = vld [vmem:[#allocation2 + $0x30] sm:$0xff]
      %v531 = vld [vmem:[#allocation2 + $0x38] sm:$0xff]
      %v532 = vld [vmem:[#allocation2 + $0x40] sm:$0xff]
      %v533 = vld [vmem:[#allocation2 + $0x48] sm:$0xff]
      %v534 = vld [vmem:[#allocation2 + $0x50] sm:$0xff]
      %v535 = vld [vmem:[#allocation2 + $0x58] sm:$0xff]
      %v536 = vld [vmem:[#allocation2 + $0x60] sm:$0xff]
      %v537 = vld [vmem:[#allocation2 + $0x68] sm:$0xff]
      %v538 = vld [vmem:[#allocation2 + $0x70] sm:$0xff]
      %v539 = vld [vmem:[#allocation2 + $0x78] sm:$0xff]
      %v540 = vld [vmem:[%s3] sm:$0xff]
      %v541 = vld [vmem:[#allocation2 + $0x80] sm:$0xff]
      %v542 = vld [vmem:[#allocation2 + $0x88] sm:$0xff]
      %s543 = scalar_lea.vmem %s3, 8
      %v544 = vld [vmem:[%s543] sm:$0xff]
      %v546 = vsel %vm499, %v544, 0
      %v549 = vsel %vm499, %v526, 0
      %v552 = vsel %vm499, %v527, 0
      %v555 = vsel %vm499, %v528, 0
      %v558 = vsel %vm499, %v529, 0
      %v561 = vsel %vm499, %v530, 0
      %v564 = vsel %vm499, %v531, 0
      %v567 = vsel %vm499, %v532, 0
      %v570 = vsel %vm499, %v533, 0
      %v573 = vsel %vm499, %v534, 0
      %v576 = vsel %vm499, %v535, 0
      %v579 = vsel %vm499, %v536, 0
      %v582 = vsel %vm499, %v537, 0
      %v585 = vsel %vm499, %v538, 0
      %v588 = vsel %vm499, %v539, 0
      %v591 = vsel %vm499, %v541, 0
      %v594 = vsel %vm499, %v542, 0
      %596 = vmatprep.subr.mxu0 0.0
      %597 = vmatpush1.xpose.msra.mxu0 %v549
      %598 = vmatprep.subr.mxu0 0.0
      %599 = vmatpush1.xpose.msra.mxu0 %v552
      %600 = vmatprep.subr.mxu0 0.0
      %601 = vmatpush1.xpose.msra.mxu0 %v555
      %602 = vmatprep.subr.mxu0 0.0
      %603 = vmatpush1.xpose.msra.mxu0 %v558
      %604 = vmatprep.subr.mxu0 0.0
      %605 = vmatpush1.xpose.msra.mxu0 %v561
      %606 = vmatprep.subr.mxu0 0.0
      %607 = vmatpush1.xpose.msra.mxu0 %v564
      %608 = vmatprep.subr.mxu0 0.0
      %609 = vmatpush1.xpose.msra.mxu0 %v567
      %610 = vmatprep.subr.mxu0 0.0
      %611 = vmatpush1.xpose.msra.mxu0 %v570
      %612 = vmatprep.subr.mxu0 0.0
      %613 = vmatpush1.xpose.msra.mxu0 %v573
      %614 = vmatprep.subr.mxu0 0.0
      %615 = vmatpush1.xpose.msra.mxu0 %v576
      %616 = vmatprep.subr.mxu0 0.0
      %617 = vmatpush1.xpose.msra.mxu0 %v579
      %618 = vmatprep.subr.mxu0 0.0
      %619 = vmatpush1.xpose.msra.mxu0 %v582
      %620 = vmatprep.subr.mxu0 0.0
      %621 = vmatpush1.xpose.msra.mxu0 %v585
      %622 = vmatprep.subr.mxu0 0.0
      %623 = vmatpush1.xpose.msra.mxu0 %v588
      %624 = vmatprep.subr.mxu0 0.0
      %625 = vmatpush1.xpose.msra.mxu0 %v591
      %626 = vmatprep.subr.mxu0 0.0
      %627 = vmatpush1.xpose.msra.mxu0 %v594
      %628 = vmatprep.subr.mxu0 0.0
      %629 = vmatpush1.xpose.msra.mxu0 0.0
      %630 = vmatprep.subr.mxu0 0.0
      %631 = vmatpush1.xpose.msra.mxu0 0.0
      %632 = vmatprep.subr.mxu0 0.0
      %633 = vmatpush1.xpose.msra.mxu0 0.0
      %634 = vmatprep.subr.mxu0 0.0
      %635 = vmatpush1.xpose.msra.mxu0 0.0
      %636 = vmatprep.subr.mxu0 0.0
      %637 = vmatpush1.xpose.msra.mxu0 0.0
      %638 = vmatprep.subr.mxu0 0.0
      %639 = vmatpush1.xpose.msra.mxu0 0.0
      %640 = vmatprep.subr.mxu0 0.0
      %641 = vmatpush1.xpose.msra.mxu0 0.0
      %642 = vmatprep.subr.mxu0 0.0
      %643 = vmatpush1.xpose.msra.mxu0 0.0
      %644 = vmatprep.subr.mxu0 0.0
      %645 = vmatpush1.xpose.msra.mxu0 0.0
      %646 = vmatprep.subr.mxu0 0.0
      %647 = vmatpush1.xpose.msra.mxu0 0.0
      %648 = vmatprep.subr.mxu0 0.0
      %649 = vmatpush1.xpose.msra.mxu0 0.0
      %650 = vmatprep.subr.mxu0 0.0
      %651 = vmatpush1.xpose.msra.mxu0 0.0
      %652 = vmatprep.subr.mxu0 0.0
      %653 = vmatpush1.xpose.msra.mxu0 0.0
      %654 = vmatprep.subr.mxu0 0.0
      %655 = vmatpush1.xpose.msra.mxu0 0.0
      %656 = vmatprep.subr.mxu0 0.0
      %657 = vmatpush1.xpose.msra.mxu0 0.0
      %658 = vmatprep.subr.mxu0 0.0
      %659 = vmatpush1.xpose.msra.mxu0 0.0
      %660 = vmatprep.mubr.f32.mxu0 0.0
      %661 = vmatmul.mubr.f32.gmra.mrb[0].mxu0 %v546
      %v662 = vpop.f32.mrb[0].mxu0
      %v663 = vadd.f32 0.0, %v662
      %v664 = vpop.f32.mrb[0].mxu0
      %665 = vdwg.mxu0
      %v667 = vsel %vm499, %v540, 0
      %v670 = vsel %vm499, %v524, 0
      %v673 = vsel %vm499, %v525, 0
      %675 = vmatprep.subr.mxu0 0.0
      %676 = vmatpush1.xpose.msra.mxu0 %v670
      %677 = vmatprep.subr.mxu0 0.0
      %678 = vmatpush1.xpose.msra.mxu0 %v673
      %679 = vmatprep.subr.mxu0 0.0
      %680 = vmatpush1.xpose.msra.mxu0 %v549
      %681 = vmatprep.subr.mxu0 0.0
      %682 = vmatpush1.xpose.msra.mxu0 %v552
      %683 = vmatprep.subr.mxu0 0.0
      %684 = vmatpush1.xpose.msra.mxu0 %v555
      %685 = vmatprep.subr.mxu0 0.0
      %686 = vmatpush1.xpose.msra.mxu0 %v558
      %687 = vmatprep.subr.mxu0 0.0
      %688 = vmatpush1.xpose.msra.mxu0 %v561
      %689 = vmatprep.subr.mxu0 0.0
      %690 = vmatpush1.xpose.msra.mxu0 %v564
      %691 = vmatprep.subr.mxu0 0.0
      %692 = vmatpush1.xpose.msra.mxu0 %v567
      %693 = vmatprep.subr.mxu0 0.0
      %694 = vmatpush1.xpose.msra.mxu0 %v570
      %695 = vmatprep.subr.mxu0 0.0
      %696 = vmatpush1.xpose.msra.mxu0 %v573
      %697 = vmatprep.subr.mxu0 0.0
      %698 = vmatpush1.xpose.msra.mxu0 %v576
      %699 = vmatprep.subr.mxu0 0.0
      %700 = vmatpush1.xpose.msra.mxu0 %v579
      %701 = vmatprep.subr.mxu0 0.0
      %702 = vmatpush1.xpose.msra.mxu0 %v582
      %703 = vmatprep.subr.mxu0 0.0
      %704 = vmatpush1.xpose.msra.mxu0 %v585
      %705 = vmatprep.subr.mxu0 0.0
      %706 = vmatpush1.xpose.msra.mxu0 %v588
      %707 = vmatprep.subr.mxu0 0.0
      %708 = vmatpush1.xpose.msra.mxu0 0.0
      %709 = vmatprep.subr.mxu0 0.0
      %710 = vmatpush1.xpose.msra.mxu0 0.0
      %711 = vmatprep.subr.mxu0 0.0
      %712 = vmatpush1.xpose.msra.mxu0 0.0
      %713 = vmatprep.subr.mxu0 0.0
      %714 = vmatpush1.xpose.msra.mxu0 0.0
      %715 = vmatprep.subr.mxu0 0.0
      %716 = vmatpush1.xpose.msra.mxu0 0.0
      %717 = vmatprep.subr.mxu0 0.0
      %718 = vmatpush1.xpose.msra.mxu0 0.0
      %719 = vmatprep.subr.mxu0 0.0
      %720 = vmatpush1.xpose.msra.mxu0 0.0
      %721 = vmatprep.subr.mxu0 0.0
      %722 = vmatpush1.xpose.msra.mxu0 0.0
      %723 = vmatprep.subr.mxu0 0.0
      %724 = vmatpush1.xpose.msra.mxu0 0.0
      %725 = vmatprep.subr.mxu0 0.0
      %726 = vmatpush1.xpose.msra.mxu0 0.0
      %727 = vmatprep.subr.mxu0 0.0
      %728 = vmatpush1.xpose.msra.mxu0 0.0
      %729 = vmatprep.subr.mxu0 0.0
      %730 = vmatpush1.xpose.msra.mxu0 0.0
      %731 = vmatprep.subr.mxu0 0.0
      %732 = vmatpush1.xpose.msra.mxu0 0.0
      %733 = vmatprep.subr.mxu0 0.0
      %734 = vmatpush1.xpose.msra.mxu0 0.0
      %735 = vmatprep.subr.mxu0 0.0
      %736 = vmatpush1.xpose.msra.mxu0 0.0
      %737 = vmatprep.subr.mxu0 0.0
      %738 = vmatpush1.xpose.msra.mxu0 0.0
      %739 = vmatprep.mubr.f32.mxu0 0.0
      %740 = vmatmul.mubr.f32.gmra.mrb[0].mxu0 %v667
      %v741 = vpop.f32.mrb[0].mxu0
      %v742 = vadd.f32 %v663, %v741
      %v743 = vpop.f32.mrb[0].mxu0
      %744 = vdwg.mxu0
      %v745 = vld [vmem:[#allocation2 + $0x20] sm:$0xff]
      %v746 = vld [vmem:[#allocation2 + $0x28] sm:$0xff]
      %v747 = vld [vmem:[#allocation2 + $0x30] sm:$0xff]
      %v748 = vld [vmem:[#allocation2 + $0x38] sm:$0xff]
      %v749 = vld [vmem:[#allocation2 + $0x40] sm:$0xff]
      %v750 = vld [vmem:[#allocation2 + $0x48] sm:$0xff]
      %v751 = vld [vmem:[#allocation2 + $0x50] sm:$0xff]
      %v752 = vld [vmem:[#allocation2 + $0x58] sm:$0xff]
      %v753 = vld [vmem:[#allocation2 + $0x60] sm:$0xff]
      %v754 = vld [vmem:[#allocation2 + $0x68] sm:$0xff]
      %v755 = vld [vmem:[#allocation2 + $0x70] sm:$0xff]
      %v756 = vld [vmem:[#allocation2 + $0x78] sm:$0xff]
      %v757 = vld [vmem:[#allocation2 + $0x80] sm:$0xff]
      %v758 = vld [vmem:[#allocation2 + $0x88] sm:$0xff]
      %v759 = vld [vmem:[#allocation2 + $0x90] sm:$0xff]
      %v760 = vld [vmem:[#allocation2 + $0x98] sm:$0xff]
      %s761 = scalar_lea.vmem %s3, 16
      %v762 = vld [vmem:[%s761] sm:$0xff]
      %v764 = vsel %vm499, %v762, 0
      %v767 = vsel %vm499, %v745, 0
      %v770 = vsel %vm499, %v746, 0
      %v773 = vsel %vm499, %v747, 0
      %v776 = vsel %vm499, %v748, 0
      %v779 = vsel %vm499, %v749, 0
      %v782 = vsel %vm499, %v750, 0
      %v785 = vsel %vm499, %v751, 0
      %v788 = vsel %vm499, %v752, 0
      %v791 = vsel %vm499, %v753, 0
      %v794 = vsel %vm499, %v754, 0
      %v797 = vsel %vm499, %v755, 0
      %v800 = vsel %vm499, %v756, 0
      %v803 = vsel %vm499, %v757, 0
      %v806 = vsel %vm499, %v758, 0
      %v809 = vsel %vm499, %v759, 0
      %v812 = vsel %vm499, %v760, 0
      %814 = vmatprep.subr.mxu0 0.0
      %815 = vmatpush1.xpose.msra.mxu0 %v767
      %816 = vmatprep.subr.mxu0 0.0
      %817 = vmatpush1.xpose.msra.mxu0 %v770
      %818 = vmatprep.subr.mxu0 0.0
      %819 = vmatpush1.xpose.msra.mxu0 %v773
      %820 = vmatprep.subr.mxu0 0.0
      %821 = vmatpush1.xpose.msra.mxu0 %v776
      %822 = vmatprep.subr.mxu0 0.0
      %823 = vmatpush1.xpose.msra.mxu0 %v779
      %824 = vmatprep.subr.mxu0 0.0
      %825 = vmatpush1.xpose.msra.mxu0 %v782
      %826 = vmatprep.subr.mxu0 0.0
      %827 = vmatpush1.xpose.msra.mxu0 %v785
      %828 = vmatprep.subr.mxu0 0.0
      %829 = vmatpush1.xpose.msra.mxu0 %v788
      %830 = vmatprep.subr.mxu0 0.0
      %831 = vmatpush1.xpose.msra.mxu0 %v791
      %832 = vmatprep.subr.mxu0 0.0
      %833 = vmatpush1.xpose.msra.mxu0 %v794
      %834 = vmatprep.subr.mxu0 0.0
      %835 = vmatpush1.xpose.msra.mxu0 %v797
      %836 = vmatprep.subr.mxu0 0.0
      %837 = vmatpush1.xpose.msra.mxu0 %v800
      %838 = vmatprep.subr.mxu0 0.0
      %839 = vmatpush1.xpose.msra.mxu0 %v803
      %840 = vmatprep.subr.mxu0 0.0
      %841 = vmatpush1.xpose.msra.mxu0 %v806
      %842 = vmatprep.subr.mxu0 0.0
      %843 = vmatpush1.xpose.msra.mxu0 %v809
      %844 = vmatprep.subr.mxu0 0.0
      %845 = vmatpush1.xpose.msra.mxu0 %v812
      %846 = vmatprep.subr.mxu0 0.0
      %847 = vmatpush1.xpose.msra.mxu0 0.0
      %848 = vmatprep.subr.mxu0 0.0
      %849 = vmatpush1.xpose.msra.mxu0 0.0
      %850 = vmatprep.subr.mxu0 0.0
      %851 = vmatpush1.xpose.msra.mxu0 0.0
      %852 = vmatprep.subr.mxu0 0.0
      %853 = vmatpush1.xpose.msra.mxu0 0.0
      %854 = vmatprep.subr.mxu0 0.0
      %855 = vmatpush1.xpose.msra.mxu0 0.0
      %856 = vmatprep.subr.mxu0 0.0
      %857 = vmatpush1.xpose.msra.mxu0 0.0
      %858 = vmatprep.subr.mxu0 0.0
      %859 = vmatpush1.xpose.msra.mxu0 0.0
      %860 = vmatprep.subr.mxu0 0.0
      %861 = vmatpush1.xpose.msra.mxu0 0.0
      %862 = vmatprep.subr.mxu0 0.0
      %863 = vmatpush1.xpose.msra.mxu0 0.0
      %864 = vmatprep.subr.mxu0 0.0
      %865 = vmatpush1.xpose.msra.mxu0 0.0
      %866 = vmatprep.subr.mxu0 0.0
      %867 = vmatpush1.xpose.msra.mxu0 0.0
      %868 = vmatprep.subr.mxu0 0.0
      %869 = vmatpush1.xpose.msra.mxu0 0.0
      %870 = vmatprep.subr.mxu0 0.0
      %871 = vmatpush1.xpose.msra.mxu0 0.0
      %872 = vmatprep.subr.mxu0 0.0
      %873 = vmatpush1.xpose.msra.mxu0 0.0
      %874 = vmatprep.subr.mxu0 0.0
      %875 = vmatpush1.xpose.msra.mxu0 0.0
      %876 = vmatprep.subr.mxu0 0.0
      %877 = vmatpush1.xpose.msra.mxu0 0.0
      %878 = vmatprep.mubr.f32.mxu0 0.0
      %879 = vmatmul.mubr.f32.gmra.mrb[0].mxu0 %v764
      %v880 = vpop.f32.mrb[0].mxu0
      %v881 = vadd.f32 0.0, %v880
      %v882 = vpop.f32.mrb[0].mxu0
      %883 = vdwg.mxu0
      %v884 = vadd.f32 %v742, %v881
      %885 = vst [vmem:[%s466] sm:$0xff] %v884
      %886 = vadd.xlane.f32.xlu0 %v884
      %v887 = vpop.xlane.xlu0 %886
      %vm888 = vcmask 7168
      %889 = vst.msk [vmem:[%s474] sm:$0xff] %vm888, %v887
      %v890 = vmul.f32 %v884, %v884
      %891 = vadd.xlane.f32.xlu0 %v890
      %v892 = vpop.xlane.xlu0 %891
      %893 = vst.msk [vmem:[%s482] sm:$0xff] %vm888, %v892
      %p894 = scmp.lt.s32.totalorder %s23, 1
      %s895 = scalar_select %p894, %s23, 1
      %p896 = scmp.lt.s32.totalorder %s24, 1
      %s897 = scalar_select %p896, %s24, 1
      %s898 = smul.addr %s895, 2
      %s899 = sadd.s32 %s897, %s898
      %s900 = smul.addr %s899, 8
      %s901 = scalar_lea.vmem %s5, %s900
      %p902 = scmp.lt.s32.totalorder %s23, 1
      %s903 = scalar_select %p902, %s23, 1
      %p904 = scmp.lt.s32.totalorder %s24, 1
      %s905 = scalar_select %p904, %s24, 1
      %s906 = smul.addr %s903, 2
      %s907 = sadd.s32 %s905, %s906
      %s908 = smul.addr %s907, 8
      %s909 = scalar_lea.vmem %s6, %s908
      %p910 = scmp.lt.s32.totalorder %s23, 1
      %s911 = scalar_select %p910, %s23, 1
      %p912 = scmp.lt.s32.totalorder %s24, 1
      %s913 = scalar_select %p912, %s24, 1
      %s914 = smul.addr %s911, 2
      %s915 = sadd.s32 %s913, %s914
      %s916 = smul.addr %s915, 8
      %s917 = scalar_lea.vmem %s7, %s916
      // Predicated region
      $region41: #{con_block_forward.2} parent=39 // pred_check
        %p918 = pneg %p187
      $region42: #{con_block_forward.2} parent=39 // pred_check_branch
        %920 = sbr.rel (%p918) target = $region44
      $region43: #{con_block_forward.2} parent=39 // pred_region
        _
      $region44: #{con_block_forward.2} parent=39 // pred_fallthru
        _
      // Predicated region
      $region45: #{con_block_forward.2} parent=39 // pred_check
        %p921 = pneg %p215
      $region46: #{con_block_forward.2} parent=39 // pred_check_branch
        %923 = sbr.rel (%p921) target = $region48
      $region47: #{con_block_forward.2} parent=39 // pred_region
        _
      $region48: #{con_block_forward.2} parent=39 // pred_fallthru
        _
      // Predicated region
      $region49: #{con_block_forward.2} parent=39 // pred_check
        %p924 = pneg %p243
      $region50: #{con_block_forward.2} parent=39 // pred_check_branch
        %926 = sbr.rel (%p924) target = $region52
      $region51: #{con_block_forward.2} parent=39 // pred_region
        _
      $region52: #{con_block_forward.2} parent=39 // pred_fallthru
        _
    $region40: #{con_block_forward.2} parent=5 // pred_fallthru
      _
    %p927 = scmp.le.s32.totalorder 2, %s14
    // Predicated region
    $region53: #{con_block_forward.2} parent=5 // pred_check
      %p928 = pneg %p927
    $region54: #{con_block_forward.2} parent=5 // pred_check_branch
      %930 = sbr.rel (%p928) target = $region56
    $region55: #{con_block_forward.2} parent=5 // pred_region
      %s931 = ssub.s32 %s14, 2
      // Predicated region
      $region57: #{con_block_forward.2} parent=55 // pred_check
        %p932 = pneg %p193
      $region58: #{con_block_forward.2} parent=55 // pred_check_branch
        %934 = sbr.rel (%p932) target = $region60
      $region59: #{con_block_forward.2} parent=55 // pred_region
        %p935 = scmp.lt.s32.totalorder %s25, 1
        %s936 = scalar_select %p935, %s25, 1
        %p937 = scmp.lt.s32.totalorder %s26, 1
        %s938 = scalar_select %p937, %s26, 1
        %s939 = smul.addr %s936, 2
        %s940 = sadd.s32 %s938, %s939
        %s941 = smul.addr %s940, 8
        %s942 = scalar_lea.vmem %s5, %s941
      $region60: #{con_block_forward.2} parent=55 // pred_fallthru
        _
      // Predicated region
      $region61: #{con_block_forward.2} parent=55 // pred_check
        %p943 = pneg %p221
      $region62: #{con_block_forward.2} parent=55 // pred_check_branch
        %945 = sbr.rel (%p943) target = $region64
      $region63: #{con_block_forward.2} parent=55 // pred_region
        %p946 = scmp.lt.s32.totalorder %s25, 1
        %s947 = scalar_select %p946, %s25, 1
        %p948 = scmp.lt.s32.totalorder %s26, 1
        %s949 = scalar_select %p948, %s26, 1
        %s950 = smul.addr %s947, 2
        %s951 = sadd.s32 %s949, %s950
        %s952 = smul.addr %s951, 8
        %s953 = scalar_lea.vmem %s6, %s952
      $region64: #{con_block_forward.2} parent=55 // pred_fallthru
        _
      // Predicated region
      $region65: #{con_block_forward.2} parent=55 // pred_check
        %p954 = pneg %p249
      $region66: #{con_block_forward.2} parent=55 // pred_check_branch
        %956 = sbr.rel (%p954) target = $region68
      $region67: #{con_block_forward.2} parent=55 // pred_region
        %p957 = scmp.lt.s32.totalorder %s25, 1
        %s958 = scalar_select %p957, %s25, 1
        %p959 = scmp.lt.s32.totalorder %s26, 1
        %s960 = scalar_select %p959, %s26, 1
        %s961 = smul.addr %s958, 2
        %s962 = sadd.s32 %s960, %s961
        %s963 = smul.addr %s962, 8
        %s964 = scalar_lea.vmem %s7, %s963
      $region68: #{con_block_forward.2} parent=55 // pred_fallthru
        _
    $region56: #{con_block_forward.2} parent=5 // pred_fallthru
      _
  $region6: #{con_block_forward.2} parent=0 // loop_footer
    %s18 = sadd.s32 1, %s14
  $region7: #{con_block_forward.2} parent=0 // loop_footer_branch
    %13 = sbr.rel target = $region3
  $region8: #{con_block_forward.2} parent=0 // loop_exit
    _

</llo_original>
